<compile_context>
chip_gen: v7x
topology: tpu7x:2x2x1
jax: 0.10.0
libtpu: 0.0.40
codegen_flags: <defaults>
</compile_context>

<pallas_src>
import jax
import jax.numpy as jnp
from jax import lax
from jax.experimental import pallas as pl
from jax.experimental.pallas import tpu as pltpu


def _round_up(x, m):
    return (x + m - 1) // m * m


def _make_lstm_kernel(seq_len, time_block, HP):
    def kernel(x_ref, wih_ref, whh_ref, b_ref, wlin_ref, blin_ref,
               out_ref, hn_ref, cn_ref, gx_scr, h_scr, c_scr):
        blk = pl.program_id(0)
        nblk = pl.num_programs(0)

        @pl.when(blk == 0)
        def _():
            h_scr[...] = jnp.zeros_like(h_scr)
            c_scr[...] = jnp.zeros_like(c_scr)

        # Per-block input projection: one (Tb, Fp) @ (Fp, 4*HP) MXU matmul,
        # hoisted out of the serial recurrence.
        gx_scr[...] = (jnp.dot(x_ref[...], wih_ref[...],
                               preferred_element_type=jnp.float32)
                       + b_ref[...])                              # (Tb, 4*HP) f32

        base = blk * time_block

        def step(t, carry):
            h, c = carry
            # W_hh read from VMEM each step (not register-hoisted).
            # TODO(synk): weight-stationary MXU (matmul_push_rhs/acc_lhs/pop)
            # would drop the per-step RHS re-stream; kept on jnp.dot for
            # portability across v5e/v6e/v7x.
            gates = (gx_scr[pl.ds(t, 1), :]
                     + jnp.dot(h.astype(jnp.bfloat16), whh_ref[...],
                               preferred_element_type=jnp.float32))  # (1, 4*HP)
            # Packed gate order i|f|o|g: one sigmoid stream over 3*HP lanes,
            # one tanh stream over the last HP lanes (gate math stays f32).
            sig = jax.nn.sigmoid(gates[:, :3 * HP])
            i_g = sig[:, 0 * HP:1 * HP]
            f_g = sig[:, 1 * HP:2 * HP]
            o_g = sig[:, 2 * HP:3 * HP]
            g_g = jnp.tanh(gates[:, 3 * HP:4 * HP])
            c_new = f_g * c + i_g * g_g
            h_new = o_g * jnp.tanh(c_new)
            # Mask zero-padded trailing timesteps (keep h/c unchanged there).
            valid = (base + t) < seq_len
            return (jnp.where(valid, h_new, h), jnp.where(valid, c_new, c))

        # Bounded unroll: enough LLO visibility to overlap MXU/EUP/VPU across
        # adjacent steps without exploding code size or live ranges.
        h, c = lax.fori_loop(0, time_block, step, (h_scr[...], c_scr[...]),
                             unroll=min(time_block, 8))
        h_scr[...] = h
        c_scr[...] = c
        hn_ref[...] = h
        cn_ref[...] = c

        @pl.when(blk == nblk - 1)
        def _():
            # Classifier head + softmax (padded classes carry -1e9 bias -> 0).
            logits = (jnp.dot(h.astype(jnp.bfloat16), wlin_ref[...],
                              preferred_element_type=jnp.float32)
                      + blin_ref[...])                            # (1, CP)
            m = jnp.max(logits, axis=-1, keepdims=True)
            e = jnp.exp(logits - m)
            denom = jnp.sum(e, axis=-1, keepdims=True)
            out_ref[...] = e * pl.reciprocal(denom, approx=True)

    return kernel


def lstm_forward(x, w_ih, w_hh, b_ih, b_hh, w_lin, b_lin, *, time_block=None):
    """x: (seq_len, n_features) f32 (time-major, unbatched, like nn.LSTM).
       w_ih: (4H, F), w_hh: (4H, H), b_ih/b_hh: (4H,),
       w_lin: (n_classes, H), b_lin: (n_classes,).
       Returns (softmax probs (n_classes,), hn (1, H), cn (1, H))."""
    seq_len, n_features = x.shape
    H = w_hh.shape[1]
    n_classes = w_lin.shape[0]
    HP = max(128, _round_up(H, 128))          # lane-aligned hidden size
    CP = max(128, _round_up(n_classes, 128))  # lane-aligned class count
    FP = max(128, _round_up(n_features, 128)) # lane-aligned feature (K) dim
    f32, bf16 = jnp.float32, jnp.bfloat16

    if time_block is None:
        time_block = min(256, _round_up(seq_len, 8))
    time_block = _round_up(time_block, 8)
    SP = _round_up(seq_len, time_block)
    nblk = SP // time_block

    perm = jnp.array([0, 1, 3, 2])            # PyTorch i|f|g|o -> packed i|f|o|g

    def pack_gate_cols(w_t, rows, rows_pad):
        # w_t: (rows, 4H), columns in PyTorch gate order i|f|g|o.
        w4 = w_t.reshape(rows, 4, H)[:, perm, :]
        out = jnp.zeros((rows_pad, 4, HP), f32).at[:rows, :, :H].set(w4)
        return out.reshape(rows_pad, 4 * HP)

    wih_t = pack_gate_cols(jnp.transpose(w_ih).astype(f32),
                           n_features, FP).astype(bf16)             # (FP, 4HP)
    whh_t = pack_gate_cols(jnp.transpose(w_hh).astype(f32),
                           H, HP).astype(bf16)                      # (HP, 4HP)
    bias4 = (b_ih + b_hh).astype(f32).reshape(4, H)[perm, :]
    bias = (jnp.zeros((4, HP), f32).at[:, :H].set(bias4)
            .reshape(1, 4 * HP))                                    # (1, 4HP)
    wlin_t = (jnp.zeros((HP, CP), f32)
              .at[:H, :n_classes].set(jnp.transpose(w_lin).astype(f32))
              .astype(bf16))                                        # (HP, CP)
    blin = (jnp.full((1, CP), -1e9, f32)
            .at[0, :n_classes].set(b_lin.astype(f32)))              # (1, CP)

    x_p = jnp.zeros((SP, FP), bf16).at[:seq_len, :n_features].set(x.astype(bf16))

    # Explicit VMEM budget: double-buffered ins/outs + scratch, with headroom.
    def nbytes(shape, dt):
        n = 1
        for s in shape:
            n *= s
        return n * jnp.dtype(dt).itemsize

    vmem_bytes = (
        2 * (nbytes((time_block, FP), bf16)
             + nbytes((FP, 4 * HP), bf16)
             + nbytes((HP, 4 * HP), bf16)
             + nbytes((1, 4 * HP), f32)
             + nbytes((HP, CP), bf16)
             + nbytes((1, CP), f32)
             + nbytes((1, CP), f32)
             + 2 * nbytes((1, HP), f32))
        + nbytes((time_block, 4 * HP), f32)
        + 2 * nbytes((1, HP), f32))
    vmem_limit = int(min(128 << 20, max(16 << 20, 2 * vmem_bytes + (2 << 20))))

    kernel = _make_lstm_kernel(seq_len, time_block, HP)

    out, hn, cn = pl.pallas_call(
        kernel,
        out_shape=(
            jax.ShapeDtypeStruct((1, CP), f32),
            jax.ShapeDtypeStruct((1, HP), f32),
            jax.ShapeDtypeStruct((1, HP), f32),
        ),
        grid_spec=pltpu.PrefetchScalarGridSpec(
            num_scalar_prefetch=0,
            grid=(nblk,),
            in_specs=[
                pl.BlockSpec((time_block, FP), lambda b: (b, 0)),   # x (streamed)
                pl.BlockSpec((FP, 4 * HP), lambda b: (0, 0)),       # W_ih^T
                pl.BlockSpec((HP, 4 * HP), lambda b: (0, 0)),       # W_hh^T
                pl.BlockSpec((1, 4 * HP), lambda b: (0, 0)),        # bias
                pl.BlockSpec((HP, CP), lambda b: (0, 0)),           # W_lin^T
                pl.BlockSpec((1, CP), lambda b: (0, 0)),            # b_lin
            ],
            out_specs=[
                pl.BlockSpec((1, CP), lambda b: (0, 0)),
                pl.BlockSpec((1, HP), lambda b: (0, 0)),
                pl.BlockSpec((1, HP), lambda b: (0, 0)),
            ],
            scratch_shapes=[
                pltpu.VMEM((time_block, 4 * HP), f32),  # per-block x projection
                pltpu.VMEM((1, HP), f32),               # h carry across blocks
                pltpu.VMEM((1, HP), f32),               # c carry across blocks
            ],
        ),
        compiler_params=pltpu.CompilerParams(
            dimension_semantics=("arbitrary",),         # serial recurrence axis
            vmem_limit_bytes=vmem_limit,
        ),
    )(x_p, wih_t, whh_t, bias, wlin_t, blin)

    return out[0, :n_classes], hn[:, :H], cn[:, :H]


def init_params(key, n_features, hidden_size, n_classes):
    """Deterministic synthetic init (uniform(-1/sqrt(H), 1/sqrt(H)), like PyTorch)."""
    k = 1.0 / jnp.sqrt(jnp.float32(hidden_size))
    keys = jax.random.split(key, 6)
    u = lambda kk, shape: jax.random.uniform(kk, shape, jnp.float32, -k, k)
    w_ih = u(keys[0], (4 * hidden_size, n_features))
    w_hh = u(keys[1], (4 * hidden_size, hidden_size))
    b_ih = u(keys[2], (4 * hidden_size,))
    b_hh = u(keys[3], (4 * hidden_size,))
    w_lin = u(keys[4], (n_classes, hidden_size))
    b_lin = u(keys[5], (n_classes,))
    return w_ih, w_hh, b_ih, b_hh, w_lin, b_lin


if __name__ == "__main__":
    seq_len, n_features, hidden_size, n_classes = 8, 16, 32, 8
    # TODO(synk): bilstm=True (bidirectional) branch not implemented; bilstm=False path only.

    key = jax.random.PRNGKey(0)
    kx, kp = jax.random.split(key)
    x = jax.random.normal(kx, (seq_len, n_features), jnp.float32)
    params = init_params(kp, n_features, hidden_size, n_classes)

    out, hn, cn = lstm_forward(x, *params)
    jax.block_until_ready((out, hn, cn))

    # Pure-JAX reference with the same bf16 operand rounding / f32 accumulation.
    w_ih, w_hh, b_ih, b_hh, w_lin, b_lin = params
    H = hidden_size
    to_bf = lambda a: a.astype(jnp.bfloat16).astype(jnp.float32)
    w_ih_b, w_hh_b, w_lin_b = to_bf(w_ih), to_bf(w_hh), to_bf(w_lin)
    x_b = to_bf(x)

    def ref_step(carry, x_t):
        h, c = carry
        g = x_t @ w_ih_b.T + (b_ih + b_hh) + to_bf(h) @ w_hh_b.T
        i = jax.nn.sigmoid(g[0:H]); f = jax.nn.sigmoid(g[H:2 * H])
        gg = jnp.tanh(g[2 * H:3 * H]); o = jax.nn.sigmoid(g[3 * H:4 * H])
        c = f * c + i * gg
        h = o * jnp.tanh(c)
        return (h, c), None

    (h_ref, c_ref), _ = lax.scan(ref_step, (jnp.zeros(H), jnp.zeros(H)), x_b)
    out_ref = jax.nn.softmax(to_bf(h_ref) @ w_lin_b.T + b_lin)

    assert jnp.allclose(out, out_ref, atol=3e-3), "out mismatch"
    assert jnp.allclose(hn[0], h_ref, atol=3e-3), "hn mismatch"
    assert jnp.allclose(cn[0], c_ref, atol=3e-3), "cn mismatch"
    print("KERNEL_OK")
</pallas_src>

<mosaic_0001>
module attributes {stable_mosaic.version = 11 : i64} {
  func.func @kernel(%arg0: i32, %arg1: memref<8x128xbf16, #tpu.memory_space<vmem>>, %arg2: memref<128x512xbf16, #tpu.memory_space<vmem>>, %arg3: memref<128x512xbf16, #tpu.memory_space<vmem>>, %arg4: memref<1x512xf32, #tpu.memory_space<vmem>>, %arg5: memref<128x128xbf16, #tpu.memory_space<vmem>>, %arg6: memref<1x128xf32, #tpu.memory_space<vmem>>, %arg7: memref<1x128xf32, #tpu.memory_space<vmem>>, %arg8: memref<1x128xf32, #tpu.memory_space<vmem>>, %arg9: memref<1x128xf32, #tpu.memory_space<vmem>>, %arg10: memref<8x512xf32, #tpu.memory_space<vmem>>, %arg11: memref<1x128xf32, #tpu.memory_space<vmem>>, %arg12: memref<1x128xf32, #tpu.memory_space<vmem>>) attributes {dimension_semantics = [#tpu.dimension_semantics<arbitrary>], iteration_bounds = array<i64: 1>, scalar_prefetch = 0 : i64, scratch_operands = 3 : i64, tpu.core_type = #tpu.core_type<tc>, window_params = [{transform_indices = @transform_0, window_bounds = array<i64: 8, 128>}, {pipeline_mode = #tpu.pipeline_mode<synchronous>, transform_indices = @transform_1, window_bounds = array<i64: 128, 512>}, {pipeline_mode = #tpu.pipeline_mode<synchronous>, transform_indices = @transform_2, window_bounds = array<i64: 128, 512>}, {pipeline_mode = #tpu.pipeline_mode<synchronous>, transform_indices = @transform_3, window_bounds = array<i64: 1, 512>}, {pipeline_mode = #tpu.pipeline_mode<synchronous>, transform_indices = @transform_4, window_bounds = array<i64: 128, 128>}, {pipeline_mode = #tpu.pipeline_mode<synchronous>, transform_indices = @transform_5, window_bounds = array<i64: 1, 128>}, {pipeline_mode = #tpu.pipeline_mode<synchronous>, transform_indices = @transform_6, window_bounds = array<i64: 1, 128>}, {pipeline_mode = #tpu.pipeline_mode<synchronous>, transform_indices = @transform_7, window_bounds = array<i64: 1, 128>}, {pipeline_mode = #tpu.pipeline_mode<synchronous>, transform_indices = @transform_8, window_bounds = array<i64: 1, 128>}]} {
    %c0_i32 = arith.constant 0 : i32
    %0 = arith.cmpi eq, %arg0, %c0_i32 : i32
    %1 = arith.extui %0 : i1 to i32
    %c0_i32_0 = arith.constant 0 : i32
    %2 = arith.cmpi ne, %1, %c0_i32_0 : i32
    scf.if %2 {
      %cst_72 = arith.constant 0.000000e+00 : f32
      %228 = vector.broadcast %cst_72 : f32 to vector<1x128xf32>
      %c0_73 = arith.constant 0 : index
      %c0_74 = arith.constant 0 : index
      %229 = vector.load %arg11[%c0_73, %c0_74] : memref<1x128xf32, #tpu.memory_space<vmem>>, vector<1x128xf32>
      tpu.vector_store %arg11[%c0_73, %c0_74], %228 {strides = array<i32>} : memref<1x128xf32, #tpu.memory_space<vmem>>, vector<1x128xf32>,
      %cst_75 = arith.constant 0.000000e+00 : f32
      %230 = vector.broadcast %cst_75 : f32 to vector<1x128xf32>
      %c0_76 = arith.constant 0 : index
      %c0_77 = arith.constant 0 : index
      %231 = vector.load %arg12[%c0_76, %c0_77] : memref<1x128xf32, #tpu.memory_space<vmem>>, vector<1x128xf32>
      tpu.vector_store %arg12[%c0_76, %c0_77], %230 {strides = array<i32>} : memref<1x128xf32, #tpu.memory_space<vmem>>, vector<1x128xf32>,
    } else {
    }
    %c0 = arith.constant 0 : index
    %c0_1 = arith.constant 0 : index
    %3 = vector.load %arg1[%c0, %c0_1] : memref<8x128xbf16, #tpu.memory_space<vmem>>, vector<8x128xbf16>
    %c0_2 = arith.constant 0 : index
    %c0_3 = arith.constant 0 : index
    %4 = vector.load %arg2[%c0_2, %c0_3] : memref<128x512xbf16, #tpu.memory_space<vmem>>, vector<128x512xbf16>
    %cst = arith.constant dense<0.000000e+00> : vector<8x512xf32>
    %5 = tpu.matmul %3, %4, %cst {dimension_numbers = #tpu.dot_dimension_numbers<[1], [0], [0], [1], [0, 0, 1, 1], [], []>} : vector<8x128xbf16>, vector<128x512xbf16>, vector<8x512xf32> -> vector<8x512xf32>
    %c0_4 = arith.constant 0 : index
    %c0_5 = arith.constant 0 : index
    %6 = vector.load %arg4[%c0_4, %c0_5] : memref<1x512xf32, #tpu.memory_space<vmem>>, vector<1x512xf32>
    %7 = vector.broadcast %6 : vector<1x512xf32> to vector<8x512xf32>
    %8 = arith.addf %5, %7 : vector<8x512xf32>
    %c0_6 = arith.constant 0 : index
    %c0_7 = arith.constant 0 : index
    %9 = vector.load %arg10[%c0_6, %c0_7] : memref<8x512xf32, #tpu.memory_space<vmem>>, vector<8x512xf32>
    tpu.vector_store %arg10[%c0_6, %c0_7], %8 {strides = array<i32>} : memref<8x512xf32, #tpu.memory_space<vmem>>, vector<8x512xf32>,
    %c8_i32 = arith.constant 8 : i32
    %10 = arith.muli %arg0, %c8_i32 : i32
    %c0_8 = arith.constant 0 : index
    %c0_9 = arith.constant 0 : index
    %11 = vector.load %arg11[%c0_8, %c0_9] : memref<1x128xf32, #tpu.memory_space<vmem>>, vector<1x128xf32>
    %c0_10 = arith.constant 0 : index
    %c0_11 = arith.constant 0 : index
    %12 = vector.load %arg12[%c0_10, %c0_11] : memref<1x128xf32, #tpu.memory_space<vmem>>, vector<1x128xf32>
    %c0_i32_12 = arith.constant 0 : i32
    %13 = arith.index_cast %c0_i32_12 : i32 to index
    %c0_13 = arith.constant 0 : index
    %14 = vector.load %arg10[%13, %c0_13] : memref<8x512xf32, #tpu.memory_space<vmem>>, vector<1x512xf32>
    %15 = arith.truncf %11 : vector<1x128xf32> to vector<1x128xbf16>
    %c0_14 = arith.constant 0 : index
    %c0_15 = arith.constant 0 : index
    %16 = vector.load %arg3[%c0_14, %c0_15] : memref<128x512xbf16, #tpu.memory_space<vmem>>, vector<128x512xbf16>
    %cst_16 = arith.constant dense<0.000000e+00> : vector<1x512xf32>
    %17 = tpu.matmul %15, %16, %cst_16 {dimension_numbers = #tpu.dot_dimension_numbers<[1], [0], [0], [1], [0, 0, 1, 1], [], []>} : vector<1x128xbf16>, vector<128x512xbf16>, vector<1x512xf32> -> vector<1x512xf32>
    %18 = arith.addf %14, %17 : vector<1x512xf32>
    %19 = vector.extract_strided_slice %18 {offsets = [0, 0], sizes = [1, 384], strides = [1, 1]} : vector<1x512xf32> to vector<1x384xf32>
    %20 = arith.negf %19 : vector<1x384xf32>
    %21 = math.exp %20 : vector<1x384xf32>
    %cst_17 = arith.constant 1.000000e+00 : f32
    %22 = vector.broadcast %cst_17 : f32 to vector<1x384xf32>
    %23 = arith.addf %22, %21 : vector<1x384xf32>
    %24 = arith.divf %22, %23 : vector<1x384xf32>
    %25 = vector.extract_strided_slice %24 {offsets = [0, 0], sizes = [1, 128], strides = [1, 1]} : vector<1x384xf32> to vector<1x128xf32>
    %26 = vector.extract_strided_slice %24 {offsets = [0, 128], sizes = [1, 128], strides = [1, 1]} : vector<1x384xf32> to vector<1x128xf32>
    %27 = vector.extract_strided_slice %24 {offsets = [0, 256], sizes = [1, 128], strides = [1, 1]} : vector<1x384xf32> to vector<1x128xf32>
    %28 = vector.extract_strided_slice %18 {offsets = [0, 384], sizes = [1, 128], strides = [1, 1]} : vector<1x512xf32> to vector<1x128xf32>
    %29 = math.tanh %28 : vector<1x128xf32>
    %30 = arith.mulf %26, %12 : vector<1x128xf32>
    %31 = arith.mulf %25, %29 : vector<1x128xf32>
    %32 = arith.addf %30, %31 : vector<1x128xf32>
    %33 = math.tanh %32 : vector<1x128xf32>
    %34 = arith.mulf %27, %33 : vector<1x128xf32>
    %35 = arith.addi %10, %c0_i32_12 : i32
    %c8_i32_18 = arith.constant 8 : i32
    %36 = arith.cmpi slt, %35, %c8_i32_18 : i32
    %37 = arith.select %36, %34, %11 : vector<1x128xf32>
    %38 = arith.select %36, %32, %12 : vector<1x128xf32>
    %c1_i32 = arith.constant 1 : i32
    %39 = arith.index_cast %c1_i32 : i32 to index
    %c0_19 = arith.constant 0 : index
    %40 = vector.load %arg10[%39, %c0_19] : memref<8x512xf32, #tpu.memory_space<vmem>>, vector<1x512xf32>
    %41 = arith.truncf %37 : vector<1x128xf32> to vector<1x128xbf16>
    %c0_20 = arith.constant 0 : index
    %c0_21 = arith.constant 0 : index
    %42 = vector.load %arg3[%c0_20, %c0_21] : memref<128x512xbf16, #tpu.memory_space<vmem>>, vector<128x512xbf16>
    %cst_22 = arith.constant dense<0.000000e+00> : vector<1x512xf32>
    %43 = tpu.matmul %41, %42, %cst_22 {dimension_numbers = #tpu.dot_dimension_numbers<[1], [0], [0], [1], [0, 0, 1, 1], [], []>} : vector<1x128xbf16>, vector<128x512xbf16>, vector<1x512xf32> -> vector<1x512xf32>
    %44 = arith.addf %40, %43 : vector<1x512xf32>
    %45 = vector.extract_strided_slice %44 {offsets = [0, 0], sizes = [1, 384], strides = [1, 1]} : vector<1x512xf32> to vector<1x384xf32>
    %46 = arith.negf %45 : vector<1x384xf32>
    %47 = math.exp %46 : vector<1x384xf32>
    %cst_23 = arith.constant 1.000000e+00 : f32
    %48 = vector.broadcast %cst_23 : f32 to vector<1x384xf32>
    %49 = arith.addf %48, %47 : vector<1x384xf32>
    %50 = arith.divf %48, %49 : vector<1x384xf32>
    %51 = vector.extract_strided_slice %50 {offsets = [0, 0], sizes = [1, 128], strides = [1, 1]} : vector<1x384xf32> to vector<1x128xf32>
    %52 = vector.extract_strided_slice %50 {offsets = [0, 128], sizes = [1, 128], strides = [1, 1]} : vector<1x384xf32> to vector<1x128xf32>
    %53 = vector.extract_strided_slice %50 {offsets = [0, 256], sizes = [1, 128], strides = [1, 1]} : vector<1x384xf32> to vector<1x128xf32>
    %54 = vector.extract_strided_slice %44 {offsets = [0, 384], sizes = [1, 128], strides = [1, 1]} : vector<1x512xf32> to vector<1x128xf32>
    %55 = math.tanh %54 : vector<1x128xf32>
    %56 = arith.mulf %52, %38 : vector<1x128xf32>
    %57 = arith.mulf %51, %55 : vector<1x128xf32>
    %58 = arith.addf %56, %57 : vector<1x128xf32>
    %59 = math.tanh %58 : vector<1x128xf32>
    %60 = arith.mulf %53, %59 : vector<1x128xf32>
    %61 = arith.addi %10, %c1_i32 : i32
    %c8_i32_24 = arith.constant 8 : i32
    %62 = arith.cmpi slt, %61, %c8_i32_24 : i32
    %63 = arith.select %62, %60, %37 : vector<1x128xf32>
    %64 = arith.select %62, %58, %38 : vector<1x128xf32>
    %c2_i32 = arith.constant 2 : i32
    %65 = arith.index_cast %c2_i32 : i32 to index
    %c0_25 = arith.constant 0 : index
    %66 = vector.load %arg10[%65, %c0_25] : memref<8x512xf32, #tpu.memory_space<vmem>>, vector<1x512xf32>
    %67 = arith.truncf %63 : vector<1x128xf32> to vector<1x128xbf16>
    %c0_26 = arith.constant 0 : index
    %c0_27 = arith.constant 0 : index
    %68 = vector.load %arg3[%c0_26, %c0_27] : memref<128x512xbf16, #tpu.memory_space<vmem>>, vector<128x512xbf16>
    %cst_28 = arith.constant dense<0.000000e+00> : vector<1x512xf32>
    %69 = tpu.matmul %67, %68, %cst_28 {dimension_numbers = #tpu.dot_dimension_numbers<[1], [0], [0], [1], [0, 0, 1, 1], [], []>} : vector<1x128xbf16>, vector<128x512xbf16>, vector<1x512xf32> -> vector<1x512xf32>
    %70 = arith.addf %66, %69 : vector<1x512xf32>
    %71 = vector.extract_strided_slice %70 {offsets = [0, 0], sizes = [1, 384], strides = [1, 1]} : vector<1x512xf32> to vector<1x384xf32>
    %72 = arith.negf %71 : vector<1x384xf32>
    %73 = math.exp %72 : vector<1x384xf32>
    %cst_29 = arith.constant 1.000000e+00 : f32
    %74 = vector.broadcast %cst_29 : f32 to vector<1x384xf32>
    %75 = arith.addf %74, %73 : vector<1x384xf32>
    %76 = arith.divf %74, %75 : vector<1x384xf32>
    %77 = vector.extract_strided_slice %76 {offsets = [0, 0], sizes = [1, 128], strides = [1, 1]} : vector<1x384xf32> to vector<1x128xf32>
    %78 = vector.extract_strided_slice %76 {offsets = [0, 128], sizes = [1, 128], strides = [1, 1]} : vector<1x384xf32> to vector<1x128xf32>
    %79 = vector.extract_strided_slice %76 {offsets = [0, 256], sizes = [1, 128], strides = [1, 1]} : vector<1x384xf32> to vector<1x128xf32>
    %80 = vector.extract_strided_slice %70 {offsets = [0, 384], sizes = [1, 128], strides = [1, 1]} : vector<1x512xf32> to vector<1x128xf32>
    %81 = math.tanh %80 : vector<1x128xf32>
    %82 = arith.mulf %78, %64 : vector<1x128xf32>
    %83 = arith.mulf %77, %81 : vector<1x128xf32>
    %84 = arith.addf %82, %83 : vector<1x128xf32>
    %85 = math.tanh %84 : vector<1x128xf32>
    %86 = arith.mulf %79, %85 : vector<1x128xf32>
    %87 = arith.addi %10, %c2_i32 : i32
    %c8_i32_30 = arith.constant 8 : i32
    %88 = arith.cmpi slt, %87, %c8_i32_30 : i32
    %89 = arith.select %88, %86, %63 : vector<1x128xf32>
    %90 = arith.select %88, %84, %64 : vector<1x128xf32>
    %c3_i32 = arith.constant 3 : i32
    %91 = arith.index_cast %c3_i32 : i32 to index
    %c0_31 = arith.constant 0 : index
    %92 = vector.load %arg10[%91, %c0_31] : memref<8x512xf32, #tpu.memory_space<vmem>>, vector<1x512xf32>
    %93 = arith.truncf %89 : vector<1x128xf32> to vector<1x128xbf16>
    %c0_32 = arith.constant 0 : index
    %c0_33 = arith.constant 0 : index
    %94 = vector.load %arg3[%c0_32, %c0_33] : memref<128x512xbf16, #tpu.memory_space<vmem>>, vector<128x512xbf16>
    %cst_34 = arith.constant dense<0.000000e+00> : vector<1x512xf32>
    %95 = tpu.matmul %93, %94, %cst_34 {dimension_numbers = #tpu.dot_dimension_numbers<[1], [0], [0], [1], [0, 0, 1, 1], [], []>} : vector<1x128xbf16>, vector<128x512xbf16>, vector<1x512xf32> -> vector<1x512xf32>
    %96 = arith.addf %92, %95 : vector<1x512xf32>
    %97 = vector.extract_strided_slice %96 {offsets = [0, 0], sizes = [1, 384], strides = [1, 1]} : vector<1x512xf32> to vector<1x384xf32>
    %98 = arith.negf %97 : vector<1x384xf32>
    %99 = math.exp %98 : vector<1x384xf32>
    %cst_35 = arith.constant 1.000000e+00 : f32
    %100 = vector.broadcast %cst_35 : f32 to vector<1x384xf32>
    %101 = arith.addf %100, %99 : vector<1x384xf32>
    %102 = arith.divf %100, %101 : vector<1x384xf32>
    %103 = vector.extract_strided_slice %102 {offsets = [0, 0], sizes = [1, 128], strides = [1, 1]} : vector<1x384xf32> to vector<1x128xf32>
    %104 = vector.extract_strided_slice %102 {offsets = [0, 128], sizes = [1, 128], strides = [1, 1]} : vector<1x384xf32> to vector<1x128xf32>
    %105 = vector.extract_strided_slice %102 {offsets = [0, 256], sizes = [1, 128], strides = [1, 1]} : vector<1x384xf32> to vector<1x128xf32>
    %106 = vector.extract_strided_slice %96 {offsets = [0, 384], sizes = [1, 128], strides = [1, 1]} : vector<1x512xf32> to vector<1x128xf32>
    %107 = math.tanh %106 : vector<1x128xf32>
    %108 = arith.mulf %104, %90 : vector<1x128xf32>
    %109 = arith.mulf %103, %107 : vector<1x128xf32>
    %110 = arith.addf %108, %109 : vector<1x128xf32>
    %111 = math.tanh %110 : vector<1x128xf32>
    %112 = arith.mulf %105, %111 : vector<1x128xf32>
    %113 = arith.addi %10, %c3_i32 : i32
    %c8_i32_36 = arith.constant 8 : i32
    %114 = arith.cmpi slt, %113, %c8_i32_36 : i32
    %115 = arith.select %114, %112, %89 : vector<1x128xf32>
    %116 = arith.select %114, %110, %90 : vector<1x128xf32>
    %c4_i32 = arith.constant 4 : i32
    %117 = arith.index_cast %c4_i32 : i32 to index
    %c0_37 = arith.constant 0 : index
    %118 = vector.load %arg10[%117, %c0_37] : memref<8x512xf32, #tpu.memory_space<vmem>>, vector<1x512xf32>
    %119 = arith.truncf %115 : vector<1x128xf32> to vector<1x128xbf16>
    %c0_38 = arith.constant 0 : index
    %c0_39 = arith.constant 0 : index
    %120 = vector.load %arg3[%c0_38, %c0_39] : memref<128x512xbf16, #tpu.memory_space<vmem>>, vector<128x512xbf16>
    %cst_40 = arith.constant dense<0.000000e+00> : vector<1x512xf32>
    %121 = tpu.matmul %119, %120, %cst_40 {dimension_numbers = #tpu.dot_dimension_numbers<[1], [0], [0], [1], [0, 0, 1, 1], [], []>} : vector<1x128xbf16>, vector<128x512xbf16>, vector<1x512xf32> -> vector<1x512xf32>
    %122 = arith.addf %118, %121 : vector<1x512xf32>
    %123 = vector.extract_strided_slice %122 {offsets = [0, 0], sizes = [1, 384], strides = [1, 1]} : vector<1x512xf32> to vector<1x384xf32>
    %124 = arith.negf %123 : vector<1x384xf32>
    %125 = math.exp %124 : vector<1x384xf32>
    %cst_41 = arith.constant 1.000000e+00 : f32
    %126 = vector.broadcast %cst_41 : f32 to vector<1x384xf32>
    %127 = arith.addf %126, %125 : vector<1x384xf32>
    %128 = arith.divf %126, %127 : vector<1x384xf32>
    %129 = vector.extract_strided_slice %128 {offsets = [0, 0], sizes = [1, 128], strides = [1, 1]} : vector<1x384xf32> to vector<1x128xf32>
    %130 = vector.extract_strided_slice %128 {offsets = [0, 128], sizes = [1, 128], strides = [1, 1]} : vector<1x384xf32> to vector<1x128xf32>
    %131 = vector.extract_strided_slice %128 {offsets = [0, 256], sizes = [1, 128], strides = [1, 1]} : vector<1x384xf32> to vector<1x128xf32>
    %132 = vector.extract_strided_slice %122 {offsets = [0, 384], sizes = [1, 128], strides = [1, 1]} : vector<1x512xf32> to vector<1x128xf32>
    %133 = math.tanh %132 : vector<1x128xf32>
    %134 = arith.mulf %130, %116 : vector<1x128xf32>
    %135 = arith.mulf %129, %133 : vector<1x128xf32>
    %136 = arith.addf %134, %135 : vector<1x128xf32>
    %137 = math.tanh %136 : vector<1x128xf32>
    %138 = arith.mulf %131, %137 : vector<1x128xf32>
    %139 = arith.addi %10, %c4_i32 : i32
    %c8_i32_42 = arith.constant 8 : i32
    %140 = arith.cmpi slt, %139, %c8_i32_42 : i32
    %141 = arith.select %140, %138, %115 : vector<1x128xf32>
    %142 = arith.select %140, %136, %116 : vector<1x128xf32>
    %c5_i32 = arith.constant 5 : i32
    %143 = arith.index_cast %c5_i32 : i32 to index
    %c0_43 = arith.constant 0 : index
    %144 = vector.load %arg10[%143, %c0_43] : memref<8x512xf32, #tpu.memory_space<vmem>>, vector<1x512xf32>
    %145 = arith.truncf %141 : vector<1x128xf32> to vector<1x128xbf16>
    %c0_44 = arith.constant 0 : index
    %c0_45 = arith.constant 0 : index
    %146 = vector.load %arg3[%c0_44, %c0_45] : memref<128x512xbf16, #tpu.memory_space<vmem>>, vector<128x512xbf16>
    %cst_46 = arith.constant dense<0.000000e+00> : vector<1x512xf32>
    %147 = tpu.matmul %145, %146, %cst_46 {dimension_numbers = #tpu.dot_dimension_numbers<[1], [0], [0], [1], [0, 0, 1, 1], [], []>} : vector<1x128xbf16>, vector<128x512xbf16>, vector<1x512xf32> -> vector<1x512xf32>
    %148 = arith.addf %144, %147 : vector<1x512xf32>
    %149 = vector.extract_strided_slice %148 {offsets = [0, 0], sizes = [1, 384], strides = [1, 1]} : vector<1x512xf32> to vector<1x384xf32>
    %150 = arith.negf %149 : vector<1x384xf32>
    %151 = math.exp %150 : vector<1x384xf32>
    %cst_47 = arith.constant 1.000000e+00 : f32
    %152 = vector.broadcast %cst_47 : f32 to vector<1x384xf32>
    %153 = arith.addf %152, %151 : vector<1x384xf32>
    %154 = arith.divf %152, %153 : vector<1x384xf32>
    %155 = vector.extract_strided_slice %154 {offsets = [0, 0], sizes = [1, 128], strides = [1, 1]} : vector<1x384xf32> to vector<1x128xf32>
    %156 = vector.extract_strided_slice %154 {offsets = [0, 128], sizes = [1, 128], strides = [1, 1]} : vector<1x384xf32> to vector<1x128xf32>
    %157 = vector.extract_strided_slice %154 {offsets = [0, 256], sizes = [1, 128], strides = [1, 1]} : vector<1x384xf32> to vector<1x128xf32>
    %158 = vector.extract_strided_slice %148 {offsets = [0, 384], sizes = [1, 128], strides = [1, 1]} : vector<1x512xf32> to vector<1x128xf32>
    %159 = math.tanh %158 : vector<1x128xf32>
    %160 = arith.mulf %156, %142 : vector<1x128xf32>
    %161 = arith.mulf %155, %159 : vector<1x128xf32>
    %162 = arith.addf %160, %161 : vector<1x128xf32>
    %163 = math.tanh %162 : vector<1x128xf32>
    %164 = arith.mulf %157, %163 : vector<1x128xf32>
    %165 = arith.addi %10, %c5_i32 : i32
    %c8_i32_48 = arith.constant 8 : i32
    %166 = arith.cmpi slt, %165, %c8_i32_48 : i32
    %167 = arith.select %166, %164, %141 : vector<1x128xf32>
    %168 = arith.select %166, %162, %142 : vector<1x128xf32>
    %c6_i32 = arith.constant 6 : i32
    %169 = arith.index_cast %c6_i32 : i32 to index
    %c0_49 = arith.constant 0 : index
    %170 = vector.load %arg10[%169, %c0_49] : memref<8x512xf32, #tpu.memory_space<vmem>>, vector<1x512xf32>
    %171 = arith.truncf %167 : vector<1x128xf32> to vector<1x128xbf16>
    %c0_50 = arith.constant 0 : index
    %c0_51 = arith.constant 0 : index
    %172 = vector.load %arg3[%c0_50, %c0_51] : memref<128x512xbf16, #tpu.memory_space<vmem>>, vector<128x512xbf16>
    %cst_52 = arith.constant dense<0.000000e+00> : vector<1x512xf32>
    %173 = tpu.matmul %171, %172, %cst_52 {dimension_numbers = #tpu.dot_dimension_numbers<[1], [0], [0], [1], [0, 0, 1, 1], [], []>} : vector<1x128xbf16>, vector<128x512xbf16>, vector<1x512xf32> -> vector<1x512xf32>
    %174 = arith.addf %170, %173 : vector<1x512xf32>
    %175 = vector.extract_strided_slice %174 {offsets = [0, 0], sizes = [1, 384], strides = [1, 1]} : vector<1x512xf32> to vector<1x384xf32>
    %176 = arith.negf %175 : vector<1x384xf32>
    %177 = math.exp %176 : vector<1x384xf32>
    %cst_53 = arith.constant 1.000000e+00 : f32
    %178 = vector.broadcast %cst_53 : f32 to vector<1x384xf32>
    %179 = arith.addf %178, %177 : vector<1x384xf32>
    %180 = arith.divf %178, %179 : vector<1x384xf32>
    %181 = vector.extract_strided_slice %180 {offsets = [0, 0], sizes = [1, 128], strides = [1, 1]} : vector<1x384xf32> to vector<1x128xf32>
    %182 = vector.extract_strided_slice %180 {offsets = [0, 128], sizes = [1, 128], strides = [1, 1]} : vector<1x384xf32> to vector<1x128xf32>
    %183 = vector.extract_strided_slice %180 {offsets = [0, 256], sizes = [1, 128], strides = [1, 1]} : vector<1x384xf32> to vector<1x128xf32>
    %184 = vector.extract_strided_slice %174 {offsets = [0, 384], sizes = [1, 128], strides = [1, 1]} : vector<1x512xf32> to vector<1x128xf32>
    %185 = math.tanh %184 : vector<1x128xf32>
    %186 = arith.mulf %182, %168 : vector<1x128xf32>
    %187 = arith.mulf %181, %185 : vector<1x128xf32>
    %188 = arith.addf %186, %187 : vector<1x128xf32>
    %189 = math.tanh %188 : vector<1x128xf32>
    %190 = arith.mulf %183, %189 : vector<1x128xf32>
    %191 = arith.addi %10, %c6_i32 : i32
    %c8_i32_54 = arith.constant 8 : i32
    %192 = arith.cmpi slt, %191, %c8_i32_54 : i32
    %193 = arith.select %192, %190, %167 : vector<1x128xf32>
    %194 = arith.select %192, %188, %168 : vector<1x128xf32>
    %c7_i32 = arith.constant 7 : i32
    %195 = arith.index_cast %c7_i32 : i32 to index
    %c0_55 = arith.constant 0 : index
    %196 = vector.load %arg10[%195, %c0_55] : memref<8x512xf32, #tpu.memory_space<vmem>>, vector<1x512xf32>
    %197 = arith.truncf %193 : vector<1x128xf32> to vector<1x128xbf16>
    %c0_56 = arith.constant 0 : index
    %c0_57 = arith.constant 0 : index
    %198 = vector.load %arg3[%c0_56, %c0_57] : memref<128x512xbf16, #tpu.memory_space<vmem>>, vector<128x512xbf16>
    %cst_58 = arith.constant dense<0.000000e+00> : vector<1x512xf32>
    %199 = tpu.matmul %197, %198, %cst_58 {dimension_numbers = #tpu.dot_dimension_numbers<[1], [0], [0], [1], [0, 0, 1, 1], [], []>} : vector<1x128xbf16>, vector<128x512xbf16>, vector<1x512xf32> -> vector<1x512xf32>
    %200 = arith.addf %196, %199 : vector<1x512xf32>
    %201 = vector.extract_strided_slice %200 {offsets = [0, 0], sizes = [1, 384], strides = [1, 1]} : vector<1x512xf32> to vector<1x384xf32>
    %202 = arith.negf %201 : vector<1x384xf32>
    %203 = math.exp %202 : vector<1x384xf32>
    %cst_59 = arith.constant 1.000000e+00 : f32
    %204 = vector.broadcast %cst_59 : f32 to vector<1x384xf32>
    %205 = arith.addf %204, %203 : vector<1x384xf32>
    %206 = arith.divf %204, %205 : vector<1x384xf32>
    %207 = vector.extract_strided_slice %206 {offsets = [0, 0], sizes = [1, 128], strides = [1, 1]} : vector<1x384xf32> to vector<1x128xf32>
    %208 = vector.extract_strided_slice %206 {offsets = [0, 128], sizes = [1, 128], strides = [1, 1]} : vector<1x384xf32> to vector<1x128xf32>
    %209 = vector.extract_strided_slice %206 {offsets = [0, 256], sizes = [1, 128], strides = [1, 1]} : vector<1x384xf32> to vector<1x128xf32>
    %210 = vector.extract_strided_slice %200 {offsets = [0, 384], sizes = [1, 128], strides = [1, 1]} : vector<1x512xf32> to vector<1x128xf32>
    %211 = math.tanh %210 : vector<1x128xf32>
    %212 = arith.mulf %208, %194 : vector<1x128xf32>
    %213 = arith.mulf %207, %211 : vector<1x128xf32>
    %214 = arith.addf %212, %213 : vector<1x128xf32>
    %215 = math.tanh %214 : vector<1x128xf32>
    %216 = arith.mulf %209, %215 : vector<1x128xf32>
    %217 = arith.addi %10, %c7_i32 : i32
    %c8_i32_60 = arith.constant 8 : i32
    %218 = arith.cmpi slt, %217, %c8_i32_60 : i32
    %219 = arith.select %218, %216, %193 : vector<1x128xf32>
    %220 = arith.select %218, %214, %194 : vector<1x128xf32>
    %c8_i32_61 = arith.constant 8 : i32
    %c0_62 = arith.constant 0 : index
    %c0_63 = arith.constant 0 : index
    %221 = vector.load %arg11[%c0_62, %c0_63] : memref<1x128xf32, #tpu.memory_space<vmem>>, vector<1x128xf32>
    tpu.vector_store %arg11[%c0_62, %c0_63], %219 {strides = array<i32>} : memref<1x128xf32, #tpu.memory_space<vmem>>, vector<1x128xf32>,
    %c0_64 = arith.constant 0 : index
    %c0_65 = arith.constant 0 : index
    %222 = vector.load %arg12[%c0_64, %c0_65] : memref<1x128xf32, #tpu.memory_space<vmem>>, vector<1x128xf32>
    tpu.vector_store %arg12[%c0_64, %c0_65], %220 {strides = array<i32>} : memref<1x128xf32, #tpu.memory_space<vmem>>, vector<1x128xf32>,
    %c0_66 = arith.constant 0 : index
    %c0_67 = arith.constant 0 : index
    %223 = vector.load %arg8[%c0_66, %c0_67] : memref<1x128xf32, #tpu.memory_space<vmem>>, vector<1x128xf32>
    tpu.vector_store %arg8[%c0_66, %c0_67], %219 {strides = array<i32>} : memref<1x128xf32, #tpu.memory_space<vmem>>, vector<1x128xf32>,
    %c0_68 = arith.constant 0 : index
    %c0_69 = arith.constant 0 : index
    %224 = vector.load %arg9[%c0_68, %c0_69] : memref<1x128xf32, #tpu.memory_space<vmem>>, vector<1x128xf32>
    tpu.vector_store %arg9[%c0_68, %c0_69], %220 {strides = array<i32>} : memref<1x128xf32, #tpu.memory_space<vmem>>, vector<1x128xf32>,
    %c0_i32_70 = arith.constant 0 : i32
    %225 = arith.cmpi eq, %arg0, %c0_i32_70 : i32
    %226 = arith.extui %225 : i1 to i32
    %c0_i32_71 = arith.constant 0 : i32
    %227 = arith.cmpi ne, %226, %c0_i32_71 : i32
    scf.if %227 {
      %228 = arith.truncf %219 : vector<1x128xf32> to vector<1x128xbf16>
      %c0_72 = arith.constant 0 : index
      %c0_73 = arith.constant 0 : index
      %229 = vector.load %arg5[%c0_72, %c0_73] : memref<128x128xbf16, #tpu.memory_space<vmem>>, vector<128x128xbf16>
      %cst_74 = arith.constant dense<0.000000e+00> : vector<1x128xf32>
      %230 = tpu.matmul %228, %229, %cst_74 {dimension_numbers = #tpu.dot_dimension_numbers<[1], [0], [0], [1], [0, 0, 1, 1], [], []>} : vector<1x128xbf16>, vector<128x128xbf16>, vector<1x128xf32> -> vector<1x128xf32>
      %c0_75 = arith.constant 0 : index
      %c0_76 = arith.constant 0 : index
      %231 = vector.load %arg6[%c0_75, %c0_76] : memref<1x128xf32, #tpu.memory_space<vmem>>, vector<1x128xf32>
      %232 = arith.addf %230, %231 : vector<1x128xf32>
      %cst_77 = arith.constant dense<0xFF800000> : vector<1xf32>
      %233 = vector.multi_reduction <maximumf>, %232, %cst_77 [1] : vector<1x128xf32> to vector<1xf32>
      %234 = vector.shape_cast %233 : vector<1xf32> to vector<1x1xf32>
      %235 = vector.broadcast %234 : vector<1x1xf32> to vector<1x128xf32>
      %236 = arith.subf %232, %235 : vector<1x128xf32>
      %237 = math.exp %236 : vector<1x128xf32>
      %cst_78 = arith.constant dense<0.000000e+00> : vector<1xf32>
      %238 = vector.multi_reduction <add>, %237, %cst_78 [1] : vector<1x128xf32> to vector<1xf32>
      %239 = vector.shape_cast %238 : vector<1xf32> to vector<1x1xf32>
      %240 = tpu.reciprocal %239 {approx = true} : vector<1x1xf32> -> vector<1x1xf32>
      %241 = vector.broadcast %240 : vector<1x1xf32> to vector<1x128xf32>
      %242 = arith.mulf %237, %241 : vector<1x128xf32>
      %c0_79 = arith.constant 0 : index
      %c0_80 = arith.constant 0 : index
      %243 = vector.load %arg7[%c0_79, %c0_80] : memref<1x128xf32, #tpu.memory_space<vmem>>, vector<1x128xf32>
      tpu.vector_store %arg7[%c0_79, %c0_80], %242 {strides = array<i32>} : memref<1x128xf32, #tpu.memory_space<vmem>>, vector<1x128xf32>,
    } else {
    }
    return
  }
  func.func @transform_0(%arg0: i32) -> (i32, i32) {
    %c0_i32 = arith.constant 0 : i32
    %c0_i32_0 = arith.constant 0 : i32
    return %arg0, %c0_i32 : i32, i32
  }
  func.func @transform_1(%arg0: i32) -> (i32, i32) {
    %c0_i32 = arith.constant 0 : i32
    %c0_i32_0 = arith.constant 0 : i32
    %c0_i32_1 = arith.constant 0 : i32
    return %c0_i32, %c0_i32_0 : i32, i32
  }
  func.func @transform_2(%arg0: i32) -> (i32, i32) {
    %c0_i32 = arith.constant 0 : i32
    %c0_i32_0 = arith.constant 0 : i32
    %c0_i32_1 = arith.constant 0 : i32
    return %c0_i32, %c0_i32_0 : i32, i32
  }
  func.func @transform_3(%arg0: i32) -> (i32, i32) {
    %c0_i32 = arith.constant 0 : i32
    %c0_i32_0 = arith.constant 0 : i32
    %c0_i32_1 = arith.constant 0 : i32
    return %c0_i32, %c0_i32_0 : i32, i32
  }
  func.func @transform_4(%arg0: i32) -> (i32, i32) {
    %c0_i32 = arith.constant 0 : i32
    %c0_i32_0 = arith.constant 0 : i32
    %c0_i32_1 = arith.constant 0 : i32
    return %c0_i32, %c0_i32_0 : i32, i32
  }
  func.func @transform_5(%arg0: i32) -> (i32, i32) {
    %c0_i32 = arith.constant 0 : i32
    %c0_i32_0 = arith.constant 0 : i32
    %c0_i32_1 = arith.constant 0 : i32
    return %c0_i32, %c0_i32_0 : i32, i32
  }
  func.func @transform_6(%arg0: i32) -> (i32, i32) {
    %c0_i32 = arith.constant 0 : i32
    %c0_i32_0 = arith.constant 0 : i32
    %c0_i32_1 = arith.constant 0 : i32
    return %c0_i32, %c0_i32_0 : i32, i32
  }
  func.func @transform_7(%arg0: i32) -> (i32, i32) {
    %c0_i32 = arith.constant 0 : i32
    %c0_i32_0 = arith.constant 0 : i32
    %c0_i32_1 = arith.constant 0 : i32
    return %c0_i32, %c0_i32_0 : i32, i32
  }
  func.func @transform_8(%arg0: i32) -> (i32, i32) {
    %c0_i32 = arith.constant 0 : i32
    %c0_i32_0 = arith.constant 0 : i32
    %c0_i32_1 = arith.constant 0 : i32
    return %c0_i32, %c0_i32_0 : i32, i32
  }
}

</mosaic_0001>

<llo_original>
// kernel: tpu_custom_call.1
$region0: #{tpu_custom_call.1}
  #allocation0 [shape = 'u32[]', space=smem, size = 0x4, offset = 0x4, fixed_abs, tag = 'smem constant byte address 0x4 - core index']
  #allocation1 [shape = 'u32[144,128]{1,0:T(1,128)}', space=vmem, size = 0x12000, scoped, tag = 'internal scratch']
  #allocation2 [shape = 'f32[8,512]{1,0:T(8,128)}', space=vmem, size = 0x4000, scoped, tag = 'scratch operand']
  #allocation3 [shape = 'f32[1,128]{1,0:T(1,128)}', space=vmem, size = 0x200, scoped, tag = 'scratch operand']
  #allocation4 [shape = 'f32[1,128]{1,0:T(1,128)}', space=vmem, size = 0x200, scoped, tag = 'scratch operand']
  %s0 = inlined_call_operand.hbm [shape: bf16[8,128], index: 0, kind: input, shape index: {}]
  %s1 = inlined_call_operand.hbm [shape: bf16[128,512], index: 1, kind: input, shape index: {}]
  %s2 = inlined_call_operand.hbm [shape: bf16[128,512], index: 2, kind: input, shape index: {}]
  %s3 = inlined_call_operand.vmem [shape: f32[1,512], index: 3, kind: input, shape index: {}]
  %s4 = inlined_call_operand.hbm [shape: bf16[128,128], index: 4, kind: input, shape index: {}]
  %s5 = inlined_call_operand.vmem [shape: f32[1,128], index: 5, kind: input, shape index: {}]
  %s6 = inlined_call_operand.hbm [shape: f32[1,128], index: 6, kind: output, shape index: {0}]
  %s7 = inlined_call_operand.hbm [shape: f32[1,128], index: 7, kind: output, shape index: {1}]
  %s8 = inlined_call_operand.hbm [shape: f32[1,128], index: 8, kind: output, shape index: {2}]
  %9 = xla_tuple %s6, %s7, %s8
  %s10 = sld [smem:[#allocation0]]
  $region74: #{tpu_custom_call.1} parent=0
    _
  %s12 = ssub.s32 1, %s10
  %s13 = scalar_select 0, %s12, %s10
  $region1: #{tpu_custom_call.1} parent=0
    #allocation5 [shape = 'u8[2048]{0}', space=vmem, size = 0x800, scoped, tag = 'input window, operand 0, single buffered']
    #allocation6 [shape = 's32[1]{0}', space=sflag, size = 0x4, scoped, tag = 'scoped memory for tpu_custom_call.1']
    #allocation7 [shape = 's32[1]{0}', space=sflag, size = 0x4, scoped, tag = 'scoped memory for tpu_custom_call.1']
    #allocation8 [shape = 'u8[131072]{0}', space=vmem, size = 0x20000, scoped, tag = 'input window, operand 1, single buffered']
    #allocation9 [shape = 's32[1]{0}', space=sflag, size = 0x4, scoped, tag = 'scoped memory for tpu_custom_call.1']
    #allocation10 [shape = 'u8[131072]{0}', space=vmem, size = 0x20000, scoped, tag = 'input window, operand 2, single buffered']
    #allocation11 [shape = 'u8[32768]{0}', space=vmem, size = 0x8000, scoped, tag = 'input window, operand 4, single buffered']
    #allocation12 [shape = 's32[1]{0}', space=sflag, size = 0x4, scoped, tag = 'scoped memory for tpu_custom_call.1']
    #allocation13 [shape = 'u8[512]{0}', space=vmem, size = 0x400, scoped, tag = 'output window, operand 0, single buffered']
    #allocation14 [shape = 'u8[512]{0}', space=vmem, size = 0x400, scoped, tag = 'output window, operand 1, single buffered']
    #allocation15 [shape = 's32[1]{0}', space=sflag, size = 0x4, scoped, tag = 'scoped memory for tpu_custom_call.1']
    #allocation16 [shape = 'u8[512]{0}', space=vmem, size = 0x400, scoped, tag = 'output window, operand 2, single buffered']
    %14 = vsyncpa [#allocation6], 0
    %15 = vsyncpa [#allocation9], 0
    %16 = vsyncpa [#allocation12], 0
    %17 = vsyncpa [#allocation7], 0
    %18 = vsyncpa [#allocation15], 0
    // Predicated region
    $region2: #{tpu_custom_call.1} parent=1 // pred_check
      _
    $region3: #{tpu_custom_call.1} parent=1 // pred_check_branch
      %20 = sbr.rel (0) target = $region5
    $region4: #{tpu_custom_call.1} parent=1 // pred_region
      %s22 = ssub.s32 64, 64
      %23 = vsyncadd [#allocation6], %s22
      %s25 = sshll.u32 [#allocation5], 4
      %s26 = int_to_ptr.vmem [resolvable:$true] %s25
      %28 = dma.hbm_to_vmem [thread:$0]  %s0, 64, %s26, [#allocation6]
    $region5: #{tpu_custom_call.1} parent=1 // pred_fallthru
      _
    // Predicated region
    $region6: #{tpu_custom_call.1} parent=1 // pred_check
      _
    $region7: #{tpu_custom_call.1} parent=1 // pred_check_branch
      %30 = sbr.rel (0) target = $region9
    $region8: #{tpu_custom_call.1} parent=1 // pred_region
      %s32 = ssub.s32 4096, 4096
      %33 = vsyncadd [#allocation9], %s32
      %s34 = sshll.u32 [#allocation8], 4
      %s35 = int_to_ptr.vmem [resolvable:$true] %s34
      %40 = dma.hbm_to_vmem [thread:$0]  %s1, 4096, %s35, [#allocation9], 256, 256, 16
    $region9: #{tpu_custom_call.1} parent=1 // pred_fallthru
      _
    // Predicated region
    $region10: #{tpu_custom_call.1} parent=1 // pred_check
      _
    $region11: #{tpu_custom_call.1} parent=1 // pred_check_branch
      %42 = sbr.rel (0) target = $region13
    $region12: #{tpu_custom_call.1} parent=1 // pred_region
      %s44 = ssub.s32 4096, 4096
      %45 = vsyncadd [#allocation9], %s44
      %s46 = sshll.u32 [#allocation10], 4
      %s47 = int_to_ptr.vmem [resolvable:$true] %s46
      %52 = dma.hbm_to_vmem [thread:$0]  %s2, 4096, %s47, [#allocation9], 256, 256, 16
    $region13: #{tpu_custom_call.1} parent=1 // pred_fallthru
      _
    // Predicated region
    $region14: #{tpu_custom_call.1} parent=1 // pred_check
      _
    $region15: #{tpu_custom_call.1} parent=1 // pred_check_branch
      %54 = sbr.rel (0) target = $region17
    $region16: #{tpu_custom_call.1} parent=1 // pred_region
      _
    $region17: #{tpu_custom_call.1} parent=1 // pred_fallthru
      _
    // Predicated region
    $region18: #{tpu_custom_call.1} parent=1 // pred_check
      _
    $region19: #{tpu_custom_call.1} parent=1 // pred_check_branch
      %56 = sbr.rel (0) target = $region21
    $region20: #{tpu_custom_call.1} parent=1 // pred_region
      %s58 = ssub.s32 1024, 1024
      %59 = vsyncadd [#allocation12], %s58
      %s60 = sshll.u32 [#allocation11], 4
      %s61 = int_to_ptr.vmem [resolvable:$true] %s60
      %66 = dma.hbm_to_vmem [thread:$0]  %s4, 1024, %s61, [#allocation12], 64, 64, 4
    $region21: #{tpu_custom_call.1} parent=1 // pred_fallthru
      _
    // Predicated region
    $region22: #{tpu_custom_call.1} parent=1 // pred_check
      _
    $region23: #{tpu_custom_call.1} parent=1 // pred_check_branch
      %68 = sbr.rel (0) target = $region25
    $region24: #{tpu_custom_call.1} parent=1 // pred_region
      _
    $region25: #{tpu_custom_call.1} parent=1 // pred_fallthru
      _
    // Predicated region
    $region26: #{tpu_custom_call.1} parent=1 // pred_check
      _
    $region27: #{tpu_custom_call.1} parent=1 // pred_check_branch
      %70 = sbr.rel (0) target = $region29
    $region28: #{tpu_custom_call.1} parent=1 // pred_region
      %71 = dma.done [#allocation6], 64
    $region29: #{tpu_custom_call.1} parent=1 // pred_fallthru
      _
    // Predicated region
    $region30: #{tpu_custom_call.1} parent=1 // pred_check
      _
    $region31: #{tpu_custom_call.1} parent=1 // pred_check_branch
      %73 = sbr.rel (0) target = $region33
    $region32: #{tpu_custom_call.1} parent=1 // pred_region
      %74 = dma.done [#allocation9], 4096
    $region33: #{tpu_custom_call.1} parent=1 // pred_fallthru
      _
    // Predicated region
    $region34: #{tpu_custom_call.1} parent=1 // pred_check
      _
    $region35: #{tpu_custom_call.1} parent=1 // pred_check_branch
      %76 = sbr.rel (0) target = $region37
    $region36: #{tpu_custom_call.1} parent=1 // pred_region
      %77 = dma.done [#allocation9], 4096
    $region37: #{tpu_custom_call.1} parent=1 // pred_fallthru
      _
    // Predicated region
    $region38: #{tpu_custom_call.1} parent=1 // pred_check
      _
    $region39: #{tpu_custom_call.1} parent=1 // pred_check_branch
      %79 = sbr.rel (0) target = $region41
    $region40: #{tpu_custom_call.1} parent=1 // pred_region
      %80 = dma.done [#allocation12], 1024
    $region41: #{tpu_custom_call.1} parent=1 // pred_fallthru
      _
    %p82 = scmp.eq.s32.totalorder 0, 0
    // Predicated region
    $region42: #{tpu_custom_call.1} parent=1 // pred_check
      %p83 = pneg %p82
    $region43: #{tpu_custom_call.1} parent=1 // pred_check_branch
      %85 = sbr.rel (%p83) target = $region45
    $region44: #{tpu_custom_call.1} parent=1 // pred_region
      %86 = vst [vmem:[#allocation3] sm:$0x1] 0.0
      %87 = vst [vmem:[#allocation4] sm:$0x1] 0.0
    $region45: #{tpu_custom_call.1} parent=1 // pred_fallthru
      _
    %v88 = vld [vmem:[#allocation5] sm:$0xf]
    %v89 = vld [vmem:[#allocation8] sm:$0xff]
    %v90 = vld [vmem:[#allocation8 + $0x8] sm:$0xff]
    %v91 = vld [vmem:[#allocation8 + $0x10] sm:$0xff]
    %v92 = vld [vmem:[#allocation8 + $0x18] sm:$0xff]
    %v93 = vld [vmem:[#allocation8 + $0x20] sm:$0xff]
    %v94 = vld [vmem:[#allocation8 + $0x28] sm:$0xff]
    %v95 = vld [vmem:[#allocation8 + $0x30] sm:$0xff]
    %v96 = vld [vmem:[#allocation8 + $0x38] sm:$0xff]
    %v97 = vld [vmem:[#allocation8 + $0x40] sm:$0xff]
    %v98 = vld [vmem:[#allocation8 + $0x48] sm:$0xff]
    %v99 = vld [vmem:[#allocation8 + $0x50] sm:$0xff]
    %v100 = vld [vmem:[#allocation8 + $0x58] sm:$0xff]
    %v101 = vld [vmem:[#allocation8 + $0x60] sm:$0xff]
    %v102 = vld [vmem:[#allocation8 + $0x68] sm:$0xff]
    %v103 = vld [vmem:[#allocation8 + $0x70] sm:$0xff]
    %v104 = vld [vmem:[#allocation8 + $0x78] sm:$0xff]
    %v105 = vld [vmem:[#allocation8 + $0x80] sm:$0xff]
    %v106 = vld [vmem:[#allocation8 + $0x88] sm:$0xff]
    %v107 = vld [vmem:[#allocation8 + $0x90] sm:$0xff]
    %v108 = vld [vmem:[#allocation8 + $0x98] sm:$0xff]
    %v109 = vld [vmem:[#allocation8 + $0xa0] sm:$0xff]
    %v110 = vld [vmem:[#allocation8 + $0xa8] sm:$0xff]
    %v111 = vld [vmem:[#allocation8 + $0xb0] sm:$0xff]
    %v112 = vld [vmem:[#allocation8 + $0xb8] sm:$0xff]
    %v113 = vld [vmem:[#allocation8 + $0xc0] sm:$0xff]
    %v114 = vld [vmem:[#allocation8 + $0xc8] sm:$0xff]
    %v115 = vld [vmem:[#allocation8 + $0xd0] sm:$0xff]
    %v116 = vld [vmem:[#allocation8 + $0xd8] sm:$0xff]
    %v117 = vld [vmem:[#allocation8 + $0xe0] sm:$0xff]
    %v118 = vld [vmem:[#allocation8 + $0xe8] sm:$0xff]
    %v119 = vld [vmem:[#allocation8 + $0xf0] sm:$0xff]
    %v120 = vld [vmem:[#allocation8 + $0xf8] sm:$0xff]
    %v121 = vld [vmem:[%s3] sm:$0xf]
    %v123 = vlaneseq
    %v124 = vshrl.u32 %v123, 7
    %v125 = vsub.s32 0, %v124
    %v126 = vrot.slane %v121, %v125
    %v127 = vlaneseq
    %v128 = vshrl.u32 %v127, 7
    %v129 = vsub.s32 1, %v128
    %v130 = vrot.slane %v121, %v129
    %v131 = vlaneseq
    %v132 = vshrl.u32 %v131, 7
    %v133 = vsub.s32 2, %v132
    %v134 = vrot.slane %v121, %v133
    %v135 = vlaneseq
    %v136 = vshrl.u32 %v135, 7
    %v137 = vsub.s32 3, %v136
    %v138 = vrot.slane %v121, %v137
    %v175 = vunpack.c.l.b16 %v89
    %v176 = vunpack.c.h.b16 %v89
    %v177 = vunpack.c.l.b16 %v90
    %v178 = vunpack.c.h.b16 %v90
    %v179 = vunpack.c.l.b16 %v91
    %v180 = vunpack.c.h.b16 %v91
    %v181 = vunpack.c.l.b16 %v92
    %v182 = vunpack.c.h.b16 %v92
    %v183 = vunpack.c.l.b16 %v93
    %v184 = vunpack.c.h.b16 %v93
    %v185 = vunpack.c.l.b16 %v94
    %v186 = vunpack.c.h.b16 %v94
    %v187 = vunpack.c.l.b16 %v95
    %v188 = vunpack.c.h.b16 %v95
    %v189 = vunpack.c.l.b16 %v96
    %v190 = vunpack.c.h.b16 %v96
    %v191 = vunpack.c.l.b16 %v97
    %v192 = vunpack.c.h.b16 %v97
    %v193 = vunpack.c.l.b16 %v98
    %v194 = vunpack.c.h.b16 %v98
    %v195 = vunpack.c.l.b16 %v99
    %v196 = vunpack.c.h.b16 %v99
    %v197 = vunpack.c.l.b16 %v100
    %v198 = vunpack.c.h.b16 %v100
    %v199 = vunpack.c.l.b16 %v101
    %v200 = vunpack.c.h.b16 %v101
    %v201 = vunpack.c.l.b16 %v102
    %v202 = vunpack.c.h.b16 %v102
    %v203 = vunpack.c.l.b16 %v103
    %v204 = vunpack.c.h.b16 %v103
    %v205 = vunpack.c.l.b16 %v104
    %v206 = vunpack.c.h.b16 %v104
    %v207 = vunpack.c.l.b16 %v105
    %v208 = vunpack.c.h.b16 %v105
    %v209 = vunpack.c.l.b16 %v106
    %v210 = vunpack.c.h.b16 %v106
    %v211 = vunpack.c.l.b16 %v107
    %v212 = vunpack.c.h.b16 %v107
    %v213 = vunpack.c.l.b16 %v108
    %v214 = vunpack.c.h.b16 %v108
    %v215 = vunpack.c.l.b16 %v109
    %v216 = vunpack.c.h.b16 %v109
    %v217 = vunpack.c.l.b16 %v110
    %v218 = vunpack.c.h.b16 %v110
    %v219 = vunpack.c.l.b16 %v111
    %v220 = vunpack.c.h.b16 %v111
    %v221 = vunpack.c.l.b16 %v112
    %v222 = vunpack.c.h.b16 %v112
    %v223 = vunpack.c.l.b16 %v113
    %v224 = vunpack.c.h.b16 %v113
    %v225 = vunpack.c.l.b16 %v114
    %v226 = vunpack.c.h.b16 %v114
    %v227 = vunpack.c.l.b16 %v115
    %v228 = vunpack.c.h.b16 %v115
    %v229 = vunpack.c.l.b16 %v116
    %v230 = vunpack.c.h.b16 %v116
    %v231 = vunpack.c.l.b16 %v117
    %v232 = vunpack.c.h.b16 %v117
    %v233 = vunpack.c.l.b16 %v118
    %v234 = vunpack.c.h.b16 %v118
    %v235 = vunpack.c.l.b16 %v119
    %v236 = vunpack.c.h.b16 %v119
    %v237 = vunpack.c.l.b16 %v120
    %v238 = vunpack.c.h.b16 %v120
    %v239 = vpack.c.b16 %v179, %v175
    %v240 = vpack.c.b16 %v180, %v176
    %v241 = vpack.c.b16 %v181, %v177
    %v242 = vpack.c.b16 %v182, %v178
    %v243 = vpack.c.b16 %v187, %v183
    %v244 = vpack.c.b16 %v188, %v184
    %v245 = vpack.c.b16 %v189, %v185
    %v246 = vpack.c.b16 %v190, %v186
    %v247 = vpack.c.b16 %v195, %v191
    %v248 = vpack.c.b16 %v196, %v192
    %v249 = vpack.c.b16 %v197, %v193
    %v250 = vpack.c.b16 %v198, %v194
    %v251 = vpack.c.b16 %v203, %v199
    %v252 = vpack.c.b16 %v204, %v200
    %v253 = vpack.c.b16 %v205, %v201
    %v254 = vpack.c.b16 %v206, %v202
    %v255 = vpack.c.b16 %v211, %v207
    %v256 = vpack.c.b16 %v212, %v208
    %v257 = vpack.c.b16 %v213, %v209
    %v258 = vpack.c.b16 %v214, %v210
    %v259 = vpack.c.b16 %v219, %v215
    %v260 = vpack.c.b16 %v220, %v216
    %v261 = vpack.c.b16 %v221, %v217
    %v262 = vpack.c.b16 %v222, %v218
    %v263 = vpack.c.b16 %v227, %v223
    %v264 = vpack.c.b16 %v228, %v224
    %v265 = vpack.c.b16 %v229, %v225
    %v266 = vpack.c.b16 %v230, %v226
    %v267 = vpack.c.b16 %v235, %v231
    %v268 = vpack.c.b16 %v236, %v232
    %v269 = vpack.c.b16 %v237, %v233
    %v270 = vpack.c.b16 %v238, %v234
    %303 = vmatprep.subr.bf16.mxu0 %v240
    %304 = vmatpush1.bf16.msra.mxu0 %v239
    %305 = vmatprep.subr.bf16.mxu0 %v244
    %306 = vmatpush1.bf16.msra.mxu0 %v243
    %307 = vmatprep.subr.bf16.mxu0 %v248
    %308 = vmatpush1.bf16.msra.mxu0 %v247
    %309 = vmatprep.subr.bf16.mxu0 %v252
    %310 = vmatpush1.bf16.msra.mxu0 %v251
    %311 = vmatprep.subr.bf16.mxu0 %v256
    %312 = vmatpush1.bf16.msra.mxu0 %v255
    %313 = vmatprep.subr.bf16.mxu0 %v260
    %314 = vmatpush1.bf16.msra.mxu0 %v259
    %315 = vmatprep.subr.bf16.mxu0 %v264
    %316 = vmatpush1.bf16.msra.mxu0 %v263
    %317 = vmatprep.subr.bf16.mxu0 %v268
    %318 = vmatpush1.bf16.msra.mxu0 %v267
    %319 = vmatprep.subr.bf16.mxu0 0
    %320 = vmatpush1.bf16.msra.mxu0 0
    %321 = vmatprep.subr.bf16.mxu0 0
    %322 = vmatpush1.bf16.msra.mxu0 0
    %323 = vmatprep.subr.bf16.mxu0 0
    %324 = vmatpush1.bf16.msra.mxu0 0
    %325 = vmatprep.subr.bf16.mxu0 0
    %326 = vmatpush1.bf16.msra.mxu0 0
    %327 = vmatprep.subr.bf16.mxu0 0
    %328 = vmatpush1.bf16.msra.mxu0 0
    %329 = vmatprep.subr.bf16.mxu0 0
    %330 = vmatpush1.bf16.msra.mxu0 0
    %331 = vmatprep.subr.bf16.mxu0 0
    %332 = vmatpush1.bf16.msra.mxu0 0
    %333 = vmatprep.subr.bf16.mxu0 0
    %334 = vmatpush1.bf16.msra.mxu0 0
    %335 = vmatprep.mubr.bf16.mxu0 0
    %336 = vmatmul.mubr.bf16.gmra.mrb[0].mxu0 %v88
    %v337 = vpop.f32.mrb[0].mxu0
    %v338 = vadd.f32 %v126, %v337
    %v339 = vpop.f32.mrb[0].mxu0
    %v340 = vadd.f32 %v130, %v339
    %v341 = vpop.f32.mrb[0].mxu0
    %v342 = vpop.f32.mrb[0].mxu0
    %343 = vdwg.mxu0
    %344 = vmatprep.subr.bf16.mxu0 %v242
    %345 = vmatpush1.bf16.msra.mxu0 %v241
    %346 = vmatprep.subr.bf16.mxu0 %v246
    %347 = vmatpush1.bf16.msra.mxu0 %v245
    %348 = vmatprep.subr.bf16.mxu0 %v250
    %349 = vmatpush1.bf16.msra.mxu0 %v249
    %350 = vmatprep.subr.bf16.mxu0 %v254
    %351 = vmatpush1.bf16.msra.mxu0 %v253
    %352 = vmatprep.subr.bf16.mxu0 %v258
    %353 = vmatpush1.bf16.msra.mxu0 %v257
    %354 = vmatprep.subr.bf16.mxu0 %v262
    %355 = vmatpush1.bf16.msra.mxu0 %v261
    %356 = vmatprep.subr.bf16.mxu0 %v266
    %357 = vmatpush1.bf16.msra.mxu0 %v265
    %358 = vmatprep.subr.bf16.mxu0 %v270
    %359 = vmatpush1.bf16.msra.mxu0 %v269
    %360 = vmatprep.subr.bf16.mxu0 0
    %361 = vmatpush1.bf16.msra.mxu0 0
    %362 = vmatprep.subr.bf16.mxu0 0
    %363 = vmatpush1.bf16.msra.mxu0 0
    %364 = vmatprep.subr.bf16.mxu0 0
    %365 = vmatpush1.bf16.msra.mxu0 0
    %366 = vmatprep.subr.bf16.mxu0 0
    %367 = vmatpush1.bf16.msra.mxu0 0
    %368 = vmatprep.subr.bf16.mxu0 0
    %369 = vmatpush1.bf16.msra.mxu0 0
    %370 = vmatprep.subr.bf16.mxu0 0
    %371 = vmatpush1.bf16.msra.mxu0 0
    %372 = vmatprep.subr.bf16.mxu0 0
    %373 = vmatpush1.bf16.msra.mxu0 0
    %374 = vmatprep.subr.bf16.mxu0 0
    %375 = vmatpush1.bf16.msra.mxu0 0
    %376 = vmatprep.mubr.bf16.mxu0 0
    %377 = vmatmul.mubr.bf16.gmra.mrb[0].mxu0 %v88
    %v378 = vpop.f32.mrb[0].mxu0
    %v379 = vadd.f32 %v134, %v378
    %v380 = vpop.f32.mrb[0].mxu0
    %v381 = vadd.f32 %v138, %v380
    %v382 = vpop.f32.mrb[0].mxu0
    %v383 = vpop.f32.mrb[0].mxu0
    %384 = vdwg.mxu0
    %385 = vst [vmem:[#allocation2] sm:$0xff] %v338
    %386 = vst [vmem:[#allocation2 + $0x8] sm:$0xff] %v340
    %387 = vst [vmem:[#allocation2 + $0x10] sm:$0xff] %v379
    %388 = vst [vmem:[#allocation2 + $0x18] sm:$0xff] %v381
    %s389 = smul.u32 0, 8
    %v390 = vld [vmem:[#allocation3] sm:$0x1]
    %v391 = vld [vmem:[#allocation4] sm:$0x1]
    %v392 = vld [vmem:[#allocation2] ss:$8 sm:$0xf]
    %v393 = vpack.c.bf16 %v390, %v390
    %v394 = vld [vmem:[#allocation10] sm:$0xff]
    %v395 = vld [vmem:[#allocation10 + $0x8] sm:$0xff]
    %v396 = vld [vmem:[#allocation10 + $0x10] sm:$0xff]
    %v397 = vld [vmem:[#allocation10 + $0x18] sm:$0xff]
    %v398 = vld [vmem:[#allocation10 + $0x20] sm:$0xff]
    %v399 = vld [vmem:[#allocation10 + $0x28] sm:$0xff]
    %v400 = vld [vmem:[#allocation10 + $0x30] sm:$0xff]
    %v401 = vld [vmem:[#allocation10 + $0x38] sm:$0xff]
    %v402 = vld [vmem:[#allocation10 + $0x40] sm:$0xff]
    %v403 = vld [vmem:[#allocation10 + $0x48] sm:$0xff]
    %v404 = vld [vmem:[#allocation10 + $0x50] sm:$0xff]
    %v405 = vld [vmem:[#allocation10 + $0x58] sm:$0xff]
    %v406 = vld [vmem:[#allocation10 + $0x60] sm:$0xff]
    %v407 = vld [vmem:[#allocation10 + $0x68] sm:$0xff]
    %v408 = vld [vmem:[#allocation10 + $0x70] sm:$0xff]
    %v409 = vld [vmem:[#allocation10 + $0x78] sm:$0xff]
    %v410 = vld [vmem:[#allocation10 + $0x80] sm:$0xff]
    %v411 = vld [vmem:[#allocation10 + $0x88] sm:$0xff]
    %v412 = vld [vmem:[#allocation10 + $0x90] sm:$0xff]
    %v413 = vld [vmem:[#allocation10 + $0x98] sm:$0xff]
    %v414 = vld [vmem:[#allocation10 + $0xa0] sm:$0xff]
    %v415 = vld [vmem:[#allocation10 + $0xa8] sm:$0xff]
    %v416 = vld [vmem:[#allocation10 + $0xb0] sm:$0xff]
    %v417 = vld [vmem:[#allocation10 + $0xb8] sm:$0xff]
    %v418 = vld [vmem:[#allocation10 + $0xc0] sm:$0xff]
    %v419 = vld [vmem:[#allocation10 + $0xc8] sm:$0xff]
    %v420 = vld [vmem:[#allocation10 + $0xd0] sm:$0xff]
    %v421 = vld [vmem:[#allocation10 + $0xd8] sm:$0xff]
    %v422 = vld [vmem:[#allocation10 + $0xe0] sm:$0xff]
    %v423 = vld [vmem:[#allocation10 + $0xe8] sm:$0xff]
    %v424 = vld [vmem:[#allocation10 + $0xf0] sm:$0xff]
    %v425 = vld [vmem:[#allocation10 + $0xf8] sm:$0xff]
    %v458 = vunpack.c.l.b16 %v394
    %v459 = vunpack.c.h.b16 %v394
    %v460 = vunpack.c.l.b16 %v395
    %v461 = vunpack.c.h.b16 %v395
    %v462 = vunpack.c.l.b16 %v396
    %v463 = vunpack.c.h.b16 %v396
    %v464 = vunpack.c.l.b16 %v397
    %v465 = vunpack.c.h.b16 %v397
    %v466 = vunpack.c.l.b16 %v398
    %v467 = vunpack.c.h.b16 %v398
    %v468 = vunpack.c.l.b16 %v399
    %v469 = vunpack.c.h.b16 %v399
    %v470 = vunpack.c.l.b16 %v400
    %v471 = vunpack.c.h.b16 %v400
    %v472 = vunpack.c.l.b16 %v401
    %v473 = vunpack.c.h.b16 %v401
    %v474 = vunpack.c.l.b16 %v402
    %v475 = vunpack.c.h.b16 %v402
    %v476 = vunpack.c.l.b16 %v403
    %v477 = vunpack.c.h.b16 %v403
    %v478 = vunpack.c.l.b16 %v404
    %v479 = vunpack.c.h.b16 %v404
    %v480 = vunpack.c.l.b16 %v405
    %v481 = vunpack.c.h.b16 %v405
    %v482 = vunpack.c.l.b16 %v406
    %v483 = vunpack.c.h.b16 %v406
    %v484 = vunpack.c.l.b16 %v407
    %v485 = vunpack.c.h.b16 %v407
    %v486 = vunpack.c.l.b16 %v408
    %v487 = vunpack.c.h.b16 %v408
    %v488 = vunpack.c.l.b16 %v409
    %v489 = vunpack.c.h.b16 %v409
    %v490 = vunpack.c.l.b16 %v410
    %v491 = vunpack.c.h.b16 %v410
    %v492 = vunpack.c.l.b16 %v411
    %v493 = vunpack.c.h.b16 %v411
    %v494 = vunpack.c.l.b16 %v412
    %v495 = vunpack.c.h.b16 %v412
    %v496 = vunpack.c.l.b16 %v413
    %v497 = vunpack.c.h.b16 %v413
    %v498 = vunpack.c.l.b16 %v414
    %v499 = vunpack.c.h.b16 %v414
    %v500 = vunpack.c.l.b16 %v415
    %v501 = vunpack.c.h.b16 %v415
    %v502 = vunpack.c.l.b16 %v416
    %v503 = vunpack.c.h.b16 %v416
    %v504 = vunpack.c.l.b16 %v417
    %v505 = vunpack.c.h.b16 %v417
    %v506 = vunpack.c.l.b16 %v418
    %v507 = vunpack.c.h.b16 %v418
    %v508 = vunpack.c.l.b16 %v419
    %v509 = vunpack.c.h.b16 %v419
    %v510 = vunpack.c.l.b16 %v420
    %v511 = vunpack.c.h.b16 %v420
    %v512 = vunpack.c.l.b16 %v421
    %v513 = vunpack.c.h.b16 %v421
    %v514 = vunpack.c.l.b16 %v422
    %v515 = vunpack.c.h.b16 %v422
    %v516 = vunpack.c.l.b16 %v423
    %v517 = vunpack.c.h.b16 %v423
    %v518 = vunpack.c.l.b16 %v424
    %v519 = vunpack.c.h.b16 %v424
    %v520 = vunpack.c.l.b16 %v425
    %v521 = vunpack.c.h.b16 %v425
    %v522 = vpack.c.b16 %v462, %v458
    %v523 = vpack.c.b16 %v463, %v459
    %v524 = vpack.c.b16 %v464, %v460
    %v525 = vpack.c.b16 %v465, %v461
    %v526 = vpack.c.b16 %v470, %v466
    %v527 = vpack.c.b16 %v471, %v467
    %v528 = vpack.c.b16 %v472, %v468
    %v529 = vpack.c.b16 %v473, %v469
    %v530 = vpack.c.b16 %v478, %v474
    %v531 = vpack.c.b16 %v479, %v475
    %v532 = vpack.c.b16 %v480, %v476
    %v533 = vpack.c.b16 %v481, %v477
    %v534 = vpack.c.b16 %v486, %v482
    %v535 = vpack.c.b16 %v487, %v483
    %v536 = vpack.c.b16 %v488, %v484
    %v537 = vpack.c.b16 %v489, %v485
    %v538 = vpack.c.b16 %v494, %v490
    %v539 = vpack.c.b16 %v495, %v491
    %v540 = vpack.c.b16 %v496, %v492
    %v541 = vpack.c.b16 %v497, %v493
    %v542 = vpack.c.b16 %v502, %v498
    %v543 = vpack.c.b16 %v503, %v499
    %v544 = vpack.c.b16 %v504, %v500
    %v545 = vpack.c.b16 %v505, %v501
    %v546 = vpack.c.b16 %v510, %v506
    %v547 = vpack.c.b16 %v511, %v507
    %v548 = vpack.c.b16 %v512, %v508
    %v549 = vpack.c.b16 %v513, %v509
    %v550 = vpack.c.b16 %v518, %v514
    %v551 = vpack.c.b16 %v519, %v515
    %v552 = vpack.c.b16 %v520, %v516
    %v553 = vpack.c.b16 %v521, %v517
    %586 = vmatprep.subr.bf16.mxu0 %v523
    %587 = vmatpush1.bf16.msra.mxu0 %v522
    %588 = vmatprep.subr.bf16.mxu0 %v527
    %589 = vmatpush1.bf16.msra.mxu0 %v526
    %590 = vmatprep.subr.bf16.mxu0 %v531
    %591 = vmatpush1.bf16.msra.mxu0 %v530
    %592 = vmatprep.subr.bf16.mxu0 %v535
    %593 = vmatpush1.bf16.msra.mxu0 %v534
    %594 = vmatprep.subr.bf16.mxu0 %v539
    %595 = vmatpush1.bf16.msra.mxu0 %v538
    %596 = vmatprep.subr.bf16.mxu0 %v543
    %597 = vmatpush1.bf16.msra.mxu0 %v542
    %598 = vmatprep.subr.bf16.mxu0 %v547
    %599 = vmatpush1.bf16.msra.mxu0 %v546
    %600 = vmatprep.subr.bf16.mxu0 %v551
    %601 = vmatpush1.bf16.msra.mxu0 %v550
    %602 = vmatprep.subr.bf16.mxu0 0
    %603 = vmatpush1.bf16.msra.mxu0 0
    %604 = vmatprep.subr.bf16.mxu0 0
    %605 = vmatpush1.bf16.msra.mxu0 0
    %606 = vmatprep.subr.bf16.mxu0 0
    %607 = vmatpush1.bf16.msra.mxu0 0
    %608 = vmatprep.subr.bf16.mxu0 0
    %609 = vmatpush1.bf16.msra.mxu0 0
    %610 = vmatprep.subr.bf16.mxu0 0
    %611 = vmatpush1.bf16.msra.mxu0 0
    %612 = vmatprep.subr.bf16.mxu0 0
    %613 = vmatpush1.bf16.msra.mxu0 0
    %614 = vmatprep.subr.bf16.mxu0 0
    %615 = vmatpush1.bf16.msra.mxu0 0
    %616 = vmatprep.subr.bf16.mxu0 0
    %617 = vmatpush1.bf16.msra.mxu0 0
    %618 = vmatprep.mubr.bf16.mxu0 0
    %619 = vmatmul.mubr.bf16.gmra.mrb[0].mxu0 %v393
    %v620 = vpop.f32.mrb[0].mxu0
    %v621 = vadd.f32 0.0, %v620
    %v622 = vpop.f32.mrb[0].mxu0
    %v623 = vadd.f32 0.0, %v622
    %v624 = vpop.f32.mrb[0].mxu0
    %v625 = vpop.f32.mrb[0].mxu0
    %626 = vdwg.mxu0
    %627 = vmatprep.subr.bf16.mxu0 %v525
    %628 = vmatpush1.bf16.msra.mxu0 %v524
    %629 = vmatprep.subr.bf16.mxu0 %v529
    %630 = vmatpush1.bf16.msra.mxu0 %v528
    %631 = vmatprep.subr.bf16.mxu0 %v533
    %632 = vmatpush1.bf16.msra.mxu0 %v532
    %633 = vmatprep.subr.bf16.mxu0 %v537
    %634 = vmatpush1.bf16.msra.mxu0 %v536
    %635 = vmatprep.subr.bf16.mxu0 %v541
    %636 = vmatpush1.bf16.msra.mxu0 %v540
    %637 = vmatprep.subr.bf16.mxu0 %v545
    %638 = vmatpush1.bf16.msra.mxu0 %v544
    %639 = vmatprep.subr.bf16.mxu0 %v549
    %640 = vmatpush1.bf16.msra.mxu0 %v548
    %641 = vmatprep.subr.bf16.mxu0 %v553
    %642 = vmatpush1.bf16.msra.mxu0 %v552
    %643 = vmatprep.subr.bf16.mxu0 0
    %644 = vmatpush1.bf16.msra.mxu0 0
    %645 = vmatprep.subr.bf16.mxu0 0
    %646 = vmatpush1.bf16.msra.mxu0 0
    %647 = vmatprep.subr.bf16.mxu0 0
    %648 = vmatpush1.bf16.msra.mxu0 0
    %649 = vmatprep.subr.bf16.mxu0 0
    %650 = vmatpush1.bf16.msra.mxu0 0
    %651 = vmatprep.subr.bf16.mxu0 0
    %652 = vmatpush1.bf16.msra.mxu0 0
    %653 = vmatprep.subr.bf16.mxu0 0
    %654 = vmatpush1.bf16.msra.mxu0 0
    %655 = vmatprep.subr.bf16.mxu0 0
    %656 = vmatpush1.bf16.msra.mxu0 0
    %657 = vmatprep.subr.bf16.mxu0 0
    %658 = vmatpush1.bf16.msra.mxu0 0
    %659 = vmatprep.mubr.bf16.mxu0 0
    %660 = vmatmul.mubr.bf16.gmra.mrb[0].mxu0 %v393
    %v661 = vpop.f32.mrb[0].mxu0
    %v662 = vadd.f32 0.0, %v661
    %v663 = vpop.f32.mrb[0].mxu0
    %v664 = vadd.f32 0.0, %v663
    %v665 = vpop.f32.mrb[0].mxu0
    %v666 = vpop.f32.mrb[0].mxu0
    %667 = vdwg.mxu0
    %v672 = vcombine.low %v621, %v623
    %v673 = vcombine.low %v662, %v664
    %v675 = vunpack.c.l.s4 1966171168
    %v676 = vunpack.c.0.s8 %v675
    %v677 = vlaneseq
    %v678 = vshrl.u32 %v677, 7
    %v679 = vsub.s32 %v676, %v678
    %v680 = vrot.slane %v672, %v679
    %v682 = vunpack.c.l.s4 1966171168
    %v683 = vunpack.c.0.s8 %v682
    %v684 = vlaneseq
    %v685 = vshrl.u32 %v684, 7
    %v686 = vsub.s32 %v683, %v685
    %v687 = vrot.slane %v673, %v686
    %v688 = vcombine.low %v680, %v687
    %v690 = vunpack.c.l.s4 1966171168
    %v691 = vunpack.c.0.s8 %v690
    %v692 = vlaneseq
    %v693 = vshrl.u32 %v692, 7
    %v694 = vsub.s32 %v691, %v693
    %v695 = vrot.slane %v688, %v694
    %v697 = vadd.f32 %v392, %v695
    %v698 = vxor.u32 %v697, 2147483648
    %v699 = vmul.f32 %v698, 1.442695
    %v700 = vpow.pop %v699
    %v701 = vadd.f32 %v700, 1.0
    %v702 = vrcp.pop %v701
    %v703 = vmul.f32 1.0, %v702
    %v705 = vrot.slane %v697, 3
    %v707 = vtanh.pop %v705
    %v709 = vrot.slane %v703, 1
    %v711 = vmul.f32 %v709, %v391
    %v712 = vmul.f32 %v703, %v707
    %v713 = vadd.f32 %v711, %v712
    %v714 = vtanh.pop %v713
    %v715 = vrot.slane %v703, 2
    %v717 = vmul.f32 %v715, %v714
    %p718 = scmp.lt.s32.totalorder %s389, 8
    %s719 = scalar_select %p718, 1, 0
    %v720 = vstv %s719
    %vm721 = vcmp.eq.s32.totalorder %v720, 1
    %v722 = vsel %vm721, %v717, %v390
    %v723 = vsel %vm721, %v713, %v391
    %s724 = scalar_lea.vmem [#allocation2], 1
    %v725 = vld [vmem:[%s724] ss:$8 sm:$0xf]
    %v726 = vpack.c.bf16 %v722, %v722
    %727 = vmatprep.subr.bf16.mxu0 %v523
    %728 = vmatpush1.bf16.msra.mxu0 %v522
    %729 = vmatprep.subr.bf16.mxu0 %v527
    %730 = vmatpush1.bf16.msra.mxu0 %v526
    %731 = vmatprep.subr.bf16.mxu0 %v531
    %732 = vmatpush1.bf16.msra.mxu0 %v530
    %733 = vmatprep.subr.bf16.mxu0 %v535
    %734 = vmatpush1.bf16.msra.mxu0 %v534
    %735 = vmatprep.subr.bf16.mxu0 %v539
    %736 = vmatpush1.bf16.msra.mxu0 %v538
    %737 = vmatprep.subr.bf16.mxu0 %v543
    %738 = vmatpush1.bf16.msra.mxu0 %v542
    %739 = vmatprep.subr.bf16.mxu0 %v547
    %740 = vmatpush1.bf16.msra.mxu0 %v546
    %741 = vmatprep.subr.bf16.mxu0 %v551
    %742 = vmatpush1.bf16.msra.mxu0 %v550
    %743 = vmatprep.subr.bf16.mxu0 0
    %744 = vmatpush1.bf16.msra.mxu0 0
    %745 = vmatprep.subr.bf16.mxu0 0
    %746 = vmatpush1.bf16.msra.mxu0 0
    %747 = vmatprep.subr.bf16.mxu0 0
    %748 = vmatpush1.bf16.msra.mxu0 0
    %749 = vmatprep.subr.bf16.mxu0 0
    %750 = vmatpush1.bf16.msra.mxu0 0
    %751 = vmatprep.subr.bf16.mxu0 0
    %752 = vmatpush1.bf16.msra.mxu0 0
    %753 = vmatprep.subr.bf16.mxu0 0
    %754 = vmatpush1.bf16.msra.mxu0 0
    %755 = vmatprep.subr.bf16.mxu0 0
    %756 = vmatpush1.bf16.msra.mxu0 0
    %757 = vmatprep.subr.bf16.mxu0 0
    %758 = vmatpush1.bf16.msra.mxu0 0
    %759 = vmatprep.mubr.bf16.mxu0 0
    %760 = vmatmul.mubr.bf16.gmra.mrb[0].mxu0 %v726
    %v761 = vpop.f32.mrb[0].mxu0
    %v762 = vadd.f32 0.0, %v761
    %v763 = vpop.f32.mrb[0].mxu0
    %v764 = vadd.f32 0.0, %v763
    %v765 = vpop.f32.mrb[0].mxu0
    %v766 = vpop.f32.mrb[0].mxu0
    %767 = vdwg.mxu0
    %768 = vmatprep.subr.bf16.mxu0 %v525
    %769 = vmatpush1.bf16.msra.mxu0 %v524
    %770 = vmatprep.subr.bf16.mxu0 %v529
    %771 = vmatpush1.bf16.msra.mxu0 %v528
    %772 = vmatprep.subr.bf16.mxu0 %v533
    %773 = vmatpush1.bf16.msra.mxu0 %v532
    %774 = vmatprep.subr.bf16.mxu0 %v537
    %775 = vmatpush1.bf16.msra.mxu0 %v536
    %776 = vmatprep.subr.bf16.mxu0 %v541
    %777 = vmatpush1.bf16.msra.mxu0 %v540
    %778 = vmatprep.subr.bf16.mxu0 %v545
    %779 = vmatpush1.bf16.msra.mxu0 %v544
    %780 = vmatprep.subr.bf16.mxu0 %v549
    %781 = vmatpush1.bf16.msra.mxu0 %v548
    %782 = vmatprep.subr.bf16.mxu0 %v553
    %783 = vmatpush1.bf16.msra.mxu0 %v552
    %784 = vmatprep.subr.bf16.mxu0 0
    %785 = vmatpush1.bf16.msra.mxu0 0
    %786 = vmatprep.subr.bf16.mxu0 0
    %787 = vmatpush1.bf16.msra.mxu0 0
    %788 = vmatprep.subr.bf16.mxu0 0
    %789 = vmatpush1.bf16.msra.mxu0 0
    %790 = vmatprep.subr.bf16.mxu0 0
    %791 = vmatpush1.bf16.msra.mxu0 0
    %792 = vmatprep.subr.bf16.mxu0 0
    %793 = vmatpush1.bf16.msra.mxu0 0
    %794 = vmatprep.subr.bf16.mxu0 0
    %795 = vmatpush1.bf16.msra.mxu0 0
    %796 = vmatprep.subr.bf16.mxu0 0
    %797 = vmatpush1.bf16.msra.mxu0 0
    %798 = vmatprep.subr.bf16.mxu0 0
    %799 = vmatpush1.bf16.msra.mxu0 0
    %800 = vmatprep.mubr.bf16.mxu0 0
    %801 = vmatmul.mubr.bf16.gmra.mrb[0].mxu0 %v726
    %v802 = vpop.f32.mrb[0].mxu0
    %v803 = vadd.f32 0.0, %v802
    %v804 = vpop.f32.mrb[0].mxu0
    %v805 = vadd.f32 0.0, %v804
    %v806 = vpop.f32.mrb[0].mxu0
    %v807 = vpop.f32.mrb[0].mxu0
    %808 = vdwg.mxu0
    %v813 = vcombine.low %v762, %v764
    %v814 = vcombine.low %v803, %v805
    %v816 = vunpack.c.l.s4 1966171168
    %v817 = vunpack.c.0.s8 %v816
    %v818 = vlaneseq
    %v819 = vshrl.u32 %v818, 7
    %v820 = vsub.s32 %v817, %v819
    %v821 = vrot.slane %v813, %v820
    %v823 = vunpack.c.l.s4 1966171168
    %v824 = vunpack.c.0.s8 %v823
    %v825 = vlaneseq
    %v826 = vshrl.u32 %v825, 7
    %v827 = vsub.s32 %v824, %v826
    %v828 = vrot.slane %v814, %v827
    %v829 = vcombine.low %v821, %v828
    %v831 = vunpack.c.l.s4 1966171168
    %v832 = vunpack.c.0.s8 %v831
    %v833 = vlaneseq
    %v834 = vshrl.u32 %v833, 7
    %v835 = vsub.s32 %v832, %v834
    %v836 = vrot.slane %v829, %v835
    %v838 = vadd.f32 %v725, %v836
    %v839 = vxor.u32 %v838, 2147483648
    %v840 = vmul.f32 %v839, 1.442695
    %v841 = vpow.pop %v840
    %v842 = vadd.f32 %v841, 1.0
    %v843 = vrcp.pop %v842
    %v844 = vmul.f32 1.0, %v843
    %v846 = vrot.slane %v838, 3
    %v848 = vtanh.pop %v846
    %v850 = vrot.slane %v844, 1
    %v852 = vmul.f32 %v850, %v723
    %v853 = vmul.f32 %v844, %v848
    %v854 = vadd.f32 %v852, %v853
    %v855 = vtanh.pop %v854
    %v856 = vrot.slane %v844, 2
    %v858 = vmul.f32 %v856, %v855
    %s859 = sadd.s32 %s389, 1
    %p860 = scmp.lt.s32.totalorder %s859, 8
    %s861 = scalar_select %p860, 1, 0
    %v862 = vstv %s861
    %vm863 = vcmp.eq.s32.totalorder %v862, 1
    %v864 = vsel %vm863, %v858, %v722
    %v865 = vsel %vm863, %v854, %v723
    %s866 = scalar_lea.vmem [#allocation2], 2
    %v867 = vld [vmem:[%s866] ss:$8 sm:$0xf]
    %v868 = vpack.c.bf16 %v864, %v864
    %869 = vmatprep.subr.bf16.mxu0 %v523
    %870 = vmatpush1.bf16.msra.mxu0 %v522
    %871 = vmatprep.subr.bf16.mxu0 %v527
    %872 = vmatpush1.bf16.msra.mxu0 %v526
    %873 = vmatprep.subr.bf16.mxu0 %v531
    %874 = vmatpush1.bf16.msra.mxu0 %v530
    %875 = vmatprep.subr.bf16.mxu0 %v535
    %876 = vmatpush1.bf16.msra.mxu0 %v534
    %877 = vmatprep.subr.bf16.mxu0 %v539
    %878 = vmatpush1.bf16.msra.mxu0 %v538
    %879 = vmatprep.subr.bf16.mxu0 %v543
    %880 = vmatpush1.bf16.msra.mxu0 %v542
    %881 = vmatprep.subr.bf16.mxu0 %v547
    %882 = vmatpush1.bf16.msra.mxu0 %v546
    %883 = vmatprep.subr.bf16.mxu0 %v551
    %884 = vmatpush1.bf16.msra.mxu0 %v550
    %885 = vmatprep.subr.bf16.mxu0 0
    %886 = vmatpush1.bf16.msra.mxu0 0
    %887 = vmatprep.subr.bf16.mxu0 0
    %888 = vmatpush1.bf16.msra.mxu0 0
    %889 = vmatprep.subr.bf16.mxu0 0
    %890 = vmatpush1.bf16.msra.mxu0 0
    %891 = vmatprep.subr.bf16.mxu0 0
    %892 = vmatpush1.bf16.msra.mxu0 0
    %893 = vmatprep.subr.bf16.mxu0 0
    %894 = vmatpush1.bf16.msra.mxu0 0
    %895 = vmatprep.subr.bf16.mxu0 0
    %896 = vmatpush1.bf16.msra.mxu0 0
    %897 = vmatprep.subr.bf16.mxu0 0
    %898 = vmatpush1.bf16.msra.mxu0 0
    %899 = vmatprep.subr.bf16.mxu0 0
    %900 = vmatpush1.bf16.msra.mxu0 0
    %901 = vmatprep.mubr.bf16.mxu0 0
    %902 = vmatmul.mubr.bf16.gmra.mrb[0].mxu0 %v868
    %v903 = vpop.f32.mrb[0].mxu0
    %v904 = vadd.f32 0.0, %v903
    %v905 = vpop.f32.mrb[0].mxu0
    %v906 = vadd.f32 0.0, %v905
    %v907 = vpop.f32.mrb[0].mxu0
    %v908 = vpop.f32.mrb[0].mxu0
    %909 = vdwg.mxu0
    %910 = vmatprep.subr.bf16.mxu0 %v525
    %911 = vmatpush1.bf16.msra.mxu0 %v524
    %912 = vmatprep.subr.bf16.mxu0 %v529
    %913 = vmatpush1.bf16.msra.mxu0 %v528
    %914 = vmatprep.subr.bf16.mxu0 %v533
    %915 = vmatpush1.bf16.msra.mxu0 %v532
    %916 = vmatprep.subr.bf16.mxu0 %v537
    %917 = vmatpush1.bf16.msra.mxu0 %v536
    %918 = vmatprep.subr.bf16.mxu0 %v541
    %919 = vmatpush1.bf16.msra.mxu0 %v540
    %920 = vmatprep.subr.bf16.mxu0 %v545
    %921 = vmatpush1.bf16.msra.mxu0 %v544
    %922 = vmatprep.subr.bf16.mxu0 %v549
    %923 = vmatpush1.bf16.msra.mxu0 %v548
    %924 = vmatprep.subr.bf16.mxu0 %v553
    %925 = vmatpush1.bf16.msra.mxu0 %v552
    %926 = vmatprep.subr.bf16.mxu0 0
    %927 = vmatpush1.bf16.msra.mxu0 0
    %928 = vmatprep.subr.bf16.mxu0 0
    %929 = vmatpush1.bf16.msra.mxu0 0
    %930 = vmatprep.subr.bf16.mxu0 0
    %931 = vmatpush1.bf16.msra.mxu0 0
    %932 = vmatprep.subr.bf16.mxu0 0
    %933 = vmatpush1.bf16.msra.mxu0 0
    %934 = vmatprep.subr.bf16.mxu0 0
    %935 = vmatpush1.bf16.msra.mxu0 0
    %936 = vmatprep.subr.bf16.mxu0 0
    %937 = vmatpush1.bf16.msra.mxu0 0
    %938 = vmatprep.subr.bf16.mxu0 0
    %939 = vmatpush1.bf16.msra.mxu0 0
    %940 = vmatprep.subr.bf16.mxu0 0
    %941 = vmatpush1.bf16.msra.mxu0 0
    %942 = vmatprep.mubr.bf16.mxu0 0
    %943 = vmatmul.mubr.bf16.gmra.mrb[0].mxu0 %v868
    %v944 = vpop.f32.mrb[0].mxu0
    %v945 = vadd.f32 0.0, %v944
    %v946 = vpop.f32.mrb[0].mxu0
    %v947 = vadd.f32 0.0, %v946
    %v948 = vpop.f32.mrb[0].mxu0
    %v949 = vpop.f32.mrb[0].mxu0
    %950 = vdwg.mxu0
    %v955 = vcombine.low %v904, %v906
    %v956 = vcombine.low %v945, %v947
    %v958 = vunpack.c.l.s4 1966171168
    %v959 = vunpack.c.0.s8 %v958
    %v960 = vlaneseq
    %v961 = vshrl.u32 %v960, 7
    %v962 = vsub.s32 %v959, %v961
    %v963 = vrot.slane %v955, %v962
    %v965 = vunpack.c.l.s4 1966171168
    %v966 = vunpack.c.0.s8 %v965
    %v967 = vlaneseq
    %v968 = vshrl.u32 %v967, 7
    %v969 = vsub.s32 %v966, %v968
    %v970 = vrot.slane %v956, %v969
    %v971 = vcombine.low %v963, %v970
    %v973 = vunpack.c.l.s4 1966171168
    %v974 = vunpack.c.0.s8 %v973
    %v975 = vlaneseq
    %v976 = vshrl.u32 %v975, 7
    %v977 = vsub.s32 %v974, %v976
    %v978 = vrot.slane %v971, %v977
    %v980 = vadd.f32 %v867, %v978
    %v981 = vxor.u32 %v980, 2147483648
    %v982 = vmul.f32 %v981, 1.442695
    %v983 = vpow.pop %v982
    %v984 = vadd.f32 %v983, 1.0
    %v985 = vrcp.pop %v984
    %v986 = vmul.f32 1.0, %v985
    %v988 = vrot.slane %v980, 3
    %v990 = vtanh.pop %v988
    %v992 = vrot.slane %v986, 1
    %v994 = vmul.f32 %v992, %v865
    %v995 = vmul.f32 %v986, %v990
    %v996 = vadd.f32 %v994, %v995
    %v997 = vtanh.pop %v996
    %v998 = vrot.slane %v986, 2
    %v1000 = vmul.f32 %v998, %v997
    %s1001 = sadd.s32 %s389, 2
    %p1002 = scmp.lt.s32.totalorder %s1001, 8
    %s1003 = scalar_select %p1002, 1, 0
    %v1004 = vstv %s1003
    %vm1005 = vcmp.eq.s32.totalorder %v1004, 1
    %v1006 = vsel %vm1005, %v1000, %v864
    %v1007 = vsel %vm1005, %v996, %v865
    %s1008 = scalar_lea.vmem [#allocation2], 3
    %v1009 = vld [vmem:[%s1008] ss:$8 sm:$0xf]
    %v1010 = vpack.c.bf16 %v1006, %v1006
    %1011 = vmatprep.subr.bf16.mxu0 %v523
    %1012 = vmatpush1.bf16.msra.mxu0 %v522
    %1013 = vmatprep.subr.bf16.mxu0 %v527
    %1014 = vmatpush1.bf16.msra.mxu0 %v526
    %1015 = vmatprep.subr.bf16.mxu0 %v531
    %1016 = vmatpush1.bf16.msra.mxu0 %v530
    %1017 = vmatprep.subr.bf16.mxu0 %v535
    %1018 = vmatpush1.bf16.msra.mxu0 %v534
    %1019 = vmatprep.subr.bf16.mxu0 %v539
    %1020 = vmatpush1.bf16.msra.mxu0 %v538
    %1021 = vmatprep.subr.bf16.mxu0 %v543
    %1022 = vmatpush1.bf16.msra.mxu0 %v542
    %1023 = vmatprep.subr.bf16.mxu0 %v547
    %1024 = vmatpush1.bf16.msra.mxu0 %v546
    %1025 = vmatprep.subr.bf16.mxu0 %v551
    %1026 = vmatpush1.bf16.msra.mxu0 %v550
    %1027 = vmatprep.subr.bf16.mxu0 0
    %1028 = vmatpush1.bf16.msra.mxu0 0
    %1029 = vmatprep.subr.bf16.mxu0 0
    %1030 = vmatpush1.bf16.msra.mxu0 0
    %1031 = vmatprep.subr.bf16.mxu0 0
    %1032 = vmatpush1.bf16.msra.mxu0 0
    %1033 = vmatprep.subr.bf16.mxu0 0
    %1034 = vmatpush1.bf16.msra.mxu0 0
    %1035 = vmatprep.subr.bf16.mxu0 0
    %1036 = vmatpush1.bf16.msra.mxu0 0
    %1037 = vmatprep.subr.bf16.mxu0 0
    %1038 = vmatpush1.bf16.msra.mxu0 0
    %1039 = vmatprep.subr.bf16.mxu0 0
    %1040 = vmatpush1.bf16.msra.mxu0 0
    %1041 = vmatprep.subr.bf16.mxu0 0
    %1042 = vmatpush1.bf16.msra.mxu0 0
    %1043 = vmatprep.mubr.bf16.mxu0 0
    %1044 = vmatmul.mubr.bf16.gmra.mrb[0].mxu0 %v1010
    %v1045 = vpop.f32.mrb[0].mxu0
    %v1046 = vadd.f32 0.0, %v1045
    %v1047 = vpop.f32.mrb[0].mxu0
    %v1048 = vadd.f32 0.0, %v1047
    %v1049 = vpop.f32.mrb[0].mxu0
    %v1050 = vpop.f32.mrb[0].mxu0
    %1051 = vdwg.mxu0
    %1052 = vmatprep.subr.bf16.mxu0 %v525
    %1053 = vmatpush1.bf16.msra.mxu0 %v524
    %1054 = vmatprep.subr.bf16.mxu0 %v529
    %1055 = vmatpush1.bf16.msra.mxu0 %v528
    %1056 = vmatprep.subr.bf16.mxu0 %v533
    %1057 = vmatpush1.bf16.msra.mxu0 %v532
    %1058 = vmatprep.subr.bf16.mxu0 %v537
    %1059 = vmatpush1.bf16.msra.mxu0 %v536
    %1060 = vmatprep.subr.bf16.mxu0 %v541
    %1061 = vmatpush1.bf16.msra.mxu0 %v540
    %1062 = vmatprep.subr.bf16.mxu0 %v545
    %1063 = vmatpush1.bf16.msra.mxu0 %v544
    %1064 = vmatprep.subr.bf16.mxu0 %v549
    %1065 = vmatpush1.bf16.msra.mxu0 %v548
    %1066 = vmatprep.subr.bf16.mxu0 %v553
    %1067 = vmatpush1.bf16.msra.mxu0 %v552
    %1068 = vmatprep.subr.bf16.mxu0 0
    %1069 = vmatpush1.bf16.msra.mxu0 0
    %1070 = vmatprep.subr.bf16.mxu0 0
    %1071 = vmatpush1.bf16.msra.mxu0 0
    %1072 = vmatprep.subr.bf16.mxu0 0
    %1073 = vmatpush1.bf16.msra.mxu0 0
    %1074 = vmatprep.subr.bf16.mxu0 0
    %1075 = vmatpush1.bf16.msra.mxu0 0
    %1076 = vmatprep.subr.bf16.mxu0 0
    %1077 = vmatpush1.bf16.msra.mxu0 0
    %1078 = vmatprep.subr.bf16.mxu0 0
    %1079 = vmatpush1.bf16.msra.mxu0 0
    %1080 = vmatprep.subr.bf16.mxu0 0
    %1081 = vmatpush1.bf16.msra.mxu0 0
    %1082 = vmatprep.subr.bf16.mxu0 0
    %1083 = vmatpush1.bf16.msra.mxu0 0
    %1084 = vmatprep.mubr.bf16.mxu0 0
    %1085 = vmatmul.mubr.bf16.gmra.mrb[0].mxu0 %v1010
    %v1086 = vpop.f32.mrb[0].mxu0
    %v1087 = vadd.f32 0.0, %v1086
    %v1088 = vpop.f32.mrb[0].mxu0
    %v1089 = vadd.f32 0.0, %v1088
    %v1090 = vpop.f32.mrb[0].mxu0
    %v1091 = vpop.f32.mrb[0].mxu0
    %1092 = vdwg.mxu0
    %v1097 = vcombine.low %v1046, %v1048
    %v1098 = vcombine.low %v1087, %v1089
    %v1100 = vunpack.c.l.s4 1966171168
    %v1101 = vunpack.c.0.s8 %v1100
    %v1102 = vlaneseq
    %v1103 = vshrl.u32 %v1102, 7
    %v1104 = vsub.s32 %v1101, %v1103
    %v1105 = vrot.slane %v1097, %v1104
    %v1107 = vunpack.c.l.s4 1966171168
    %v1108 = vunpack.c.0.s8 %v1107
    %v1109 = vlaneseq
    %v1110 = vshrl.u32 %v1109, 7
    %v1111 = vsub.s32 %v1108, %v1110
    %v1112 = vrot.slane %v1098, %v1111
    %v1113 = vcombine.low %v1105, %v1112
    %v1115 = vunpack.c.l.s4 1966171168
    %v1116 = vunpack.c.0.s8 %v1115
    %v1117 = vlaneseq
    %v1118 = vshrl.u32 %v1117, 7
    %v1119 = vsub.s32 %v1116, %v1118
    %v1120 = vrot.slane %v1113, %v1119
    %v1122 = vadd.f32 %v1009, %v1120
    %v1123 = vxor.u32 %v1122, 2147483648
    %v1124 = vmul.f32 %v1123, 1.442695
    %v1125 = vpow.pop %v1124
    %v1126 = vadd.f32 %v1125, 1.0
    %v1127 = vrcp.pop %v1126
    %v1128 = vmul.f32 1.0, %v1127
    %v1130 = vrot.slane %v1122, 3
    %v1132 = vtanh.pop %v1130
    %v1134 = vrot.slane %v1128, 1
    %v1136 = vmul.f32 %v1134, %v1007
    %v1137 = vmul.f32 %v1128, %v1132
    %v1138 = vadd.f32 %v1136, %v1137
    %v1139 = vtanh.pop %v1138
    %v1140 = vrot.slane %v1128, 2
    %v1142 = vmul.f32 %v1140, %v1139
    %s1143 = sadd.s32 %s389, 3
    %p1144 = scmp.lt.s32.totalorder %s1143, 8
    %s1145 = scalar_select %p1144, 1, 0
    %v1146 = vstv %s1145
    %vm1147 = vcmp.eq.s32.totalorder %v1146, 1
    %v1148 = vsel %vm1147, %v1142, %v1006
    %v1149 = vsel %vm1147, %v1138, %v1007
    %s1150 = scalar_lea.vmem [#allocation2], 4
    %v1151 = vld [vmem:[%s1150] ss:$8 sm:$0xf]
    %v1152 = vpack.c.bf16 %v1148, %v1148
    %1153 = vmatprep.subr.bf16.mxu0 %v523
    %1154 = vmatpush1.bf16.msra.mxu0 %v522
    %1155 = vmatprep.subr.bf16.mxu0 %v527
    %1156 = vmatpush1.bf16.msra.mxu0 %v526
    %1157 = vmatprep.subr.bf16.mxu0 %v531
    %1158 = vmatpush1.bf16.msra.mxu0 %v530
    %1159 = vmatprep.subr.bf16.mxu0 %v535
    %1160 = vmatpush1.bf16.msra.mxu0 %v534
    %1161 = vmatprep.subr.bf16.mxu0 %v539
    %1162 = vmatpush1.bf16.msra.mxu0 %v538
    %1163 = vmatprep.subr.bf16.mxu0 %v543
    %1164 = vmatpush1.bf16.msra.mxu0 %v542
    %1165 = vmatprep.subr.bf16.mxu0 %v547
    %1166 = vmatpush1.bf16.msra.mxu0 %v546
    %1167 = vmatprep.subr.bf16.mxu0 %v551
    %1168 = vmatpush1.bf16.msra.mxu0 %v550
    %1169 = vmatprep.subr.bf16.mxu0 0
    %1170 = vmatpush1.bf16.msra.mxu0 0
    %1171 = vmatprep.subr.bf16.mxu0 0
    %1172 = vmatpush1.bf16.msra.mxu0 0
    %1173 = vmatprep.subr.bf16.mxu0 0
    %1174 = vmatpush1.bf16.msra.mxu0 0
    %1175 = vmatprep.subr.bf16.mxu0 0
    %1176 = vmatpush1.bf16.msra.mxu0 0
    %1177 = vmatprep.subr.bf16.mxu0 0
    %1178 = vmatpush1.bf16.msra.mxu0 0
    %1179 = vmatprep.subr.bf16.mxu0 0
    %1180 = vmatpush1.bf16.msra.mxu0 0
    %1181 = vmatprep.subr.bf16.mxu0 0
    %1182 = vmatpush1.bf16.msra.mxu0 0
    %1183 = vmatprep.subr.bf16.mxu0 0
    %1184 = vmatpush1.bf16.msra.mxu0 0
    %1185 = vmatprep.mubr.bf16.mxu0 0
    %1186 = vmatmul.mubr.bf16.gmra.mrb[0].mxu0 %v1152
    %v1187 = vpop.f32.mrb[0].mxu0
    %v1188 = vadd.f32 0.0, %v1187
    %v1189 = vpop.f32.mrb[0].mxu0
    %v1190 = vadd.f32 0.0, %v1189
    %v1191 = vpop.f32.mrb[0].mxu0
    %v1192 = vpop.f32.mrb[0].mxu0
    %1193 = vdwg.mxu0
    %1194 = vmatprep.subr.bf16.mxu0 %v525
    %1195 = vmatpush1.bf16.msra.mxu0 %v524
    %1196 = vmatprep.subr.bf16.mxu0 %v529
    %1197 = vmatpush1.bf16.msra.mxu0 %v528
    %1198 = vmatprep.subr.bf16.mxu0 %v533
    %1199 = vmatpush1.bf16.msra.mxu0 %v532
    %1200 = vmatprep.subr.bf16.mxu0 %v537
    %1201 = vmatpush1.bf16.msra.mxu0 %v536
    %1202 = vmatprep.subr.bf16.mxu0 %v541
    %1203 = vmatpush1.bf16.msra.mxu0 %v540
    %1204 = vmatprep.subr.bf16.mxu0 %v545
    %1205 = vmatpush1.bf16.msra.mxu0 %v544
    %1206 = vmatprep.subr.bf16.mxu0 %v549
    %1207 = vmatpush1.bf16.msra.mxu0 %v548
    %1208 = vmatprep.subr.bf16.mxu0 %v553
    %1209 = vmatpush1.bf16.msra.mxu0 %v552
    %1210 = vmatprep.subr.bf16.mxu0 0
    %1211 = vmatpush1.bf16.msra.mxu0 0
    %1212 = vmatprep.subr.bf16.mxu0 0
    %1213 = vmatpush1.bf16.msra.mxu0 0
    %1214 = vmatprep.subr.bf16.mxu0 0
    %1215 = vmatpush1.bf16.msra.mxu0 0
    %1216 = vmatprep.subr.bf16.mxu0 0
    %1217 = vmatpush1.bf16.msra.mxu0 0
    %1218 = vmatprep.subr.bf16.mxu0 0
    %1219 = vmatpush1.bf16.msra.mxu0 0
    %1220 = vmatprep.subr.bf16.mxu0 0
    %1221 = vmatpush1.bf16.msra.mxu0 0
    %1222 = vmatprep.subr.bf16.mxu0 0
    %1223 = vmatpush1.bf16.msra.mxu0 0
    %1224 = vmatprep.subr.bf16.mxu0 0
    %1225 = vmatpush1.bf16.msra.mxu0 0
    %1226 = vmatprep.mubr.bf16.mxu0 0
    %1227 = vmatmul.mubr.bf16.gmra.mrb[0].mxu0 %v1152
    %v1228 = vpop.f32.mrb[0].mxu0
    %v1229 = vadd.f32 0.0, %v1228
    %v1230 = vpop.f32.mrb[0].mxu0
    %v1231 = vadd.f32 0.0, %v1230
    %v1232 = vpop.f32.mrb[0].mxu0
    %v1233 = vpop.f32.mrb[0].mxu0
    %1234 = vdwg.mxu0
    %v1239 = vcombine.low %v1188, %v1190
    %v1240 = vcombine.low %v1229, %v1231
    %v1242 = vunpack.c.l.s4 1966171168
    %v1243 = vunpack.c.0.s8 %v1242
    %v1244 = vlaneseq
    %v1245 = vshrl.u32 %v1244, 7
    %v1246 = vsub.s32 %v1243, %v1245
    %v1247 = vrot.slane %v1239, %v1246
    %v1249 = vunpack.c.l.s4 1966171168
    %v1250 = vunpack.c.0.s8 %v1249
    %v1251 = vlaneseq
    %v1252 = vshrl.u32 %v1251, 7
    %v1253 = vsub.s32 %v1250, %v1252
    %v1254 = vrot.slane %v1240, %v1253
    %v1255 = vcombine.low %v1247, %v1254
    %v1257 = vunpack.c.l.s4 1966171168
    %v1258 = vunpack.c.0.s8 %v1257
    %v1259 = vlaneseq
    %v1260 = vshrl.u32 %v1259, 7
    %v1261 = vsub.s32 %v1258, %v1260
    %v1262 = vrot.slane %v1255, %v1261
    %v1264 = vadd.f32 %v1151, %v1262
    %v1265 = vxor.u32 %v1264, 2147483648
    %v1266 = vmul.f32 %v1265, 1.442695
    %v1267 = vpow.pop %v1266
    %v1268 = vadd.f32 %v1267, 1.0
    %v1269 = vrcp.pop %v1268
    %v1270 = vmul.f32 1.0, %v1269
    %v1272 = vrot.slane %v1264, 3
    %v1274 = vtanh.pop %v1272
    %v1276 = vrot.slane %v1270, 1
    %v1278 = vmul.f32 %v1276, %v1149
    %v1279 = vmul.f32 %v1270, %v1274
    %v1280 = vadd.f32 %v1278, %v1279
    %v1281 = vtanh.pop %v1280
    %v1282 = vrot.slane %v1270, 2
    %v1284 = vmul.f32 %v1282, %v1281
    %s1285 = sadd.s32 %s389, 4
    %p1286 = scmp.lt.s32.totalorder %s1285, 8
    %s1287 = scalar_select %p1286, 1, 0
    %v1288 = vstv %s1287
    %vm1289 = vcmp.eq.s32.totalorder %v1288, 1
    %v1290 = vsel %vm1289, %v1284, %v1148
    %v1291 = vsel %vm1289, %v1280, %v1149
    %s1292 = scalar_lea.vmem [#allocation2], 5
    %v1293 = vld [vmem:[%s1292] ss:$8 sm:$0xf]
    %v1294 = vpack.c.bf16 %v1290, %v1290
    %1295 = vmatprep.subr.bf16.mxu0 %v523
    %1296 = vmatpush1.bf16.msra.mxu0 %v522
    %1297 = vmatprep.subr.bf16.mxu0 %v527
    %1298 = vmatpush1.bf16.msra.mxu0 %v526
    %1299 = vmatprep.subr.bf16.mxu0 %v531
    %1300 = vmatpush1.bf16.msra.mxu0 %v530
    %1301 = vmatprep.subr.bf16.mxu0 %v535
    %1302 = vmatpush1.bf16.msra.mxu0 %v534
    %1303 = vmatprep.subr.bf16.mxu0 %v539
    %1304 = vmatpush1.bf16.msra.mxu0 %v538
    %1305 = vmatprep.subr.bf16.mxu0 %v543
    %1306 = vmatpush1.bf16.msra.mxu0 %v542
    %1307 = vmatprep.subr.bf16.mxu0 %v547
    %1308 = vmatpush1.bf16.msra.mxu0 %v546
    %1309 = vmatprep.subr.bf16.mxu0 %v551
    %1310 = vmatpush1.bf16.msra.mxu0 %v550
    %1311 = vmatprep.subr.bf16.mxu0 0
    %1312 = vmatpush1.bf16.msra.mxu0 0
    %1313 = vmatprep.subr.bf16.mxu0 0
    %1314 = vmatpush1.bf16.msra.mxu0 0
    %1315 = vmatprep.subr.bf16.mxu0 0
    %1316 = vmatpush1.bf16.msra.mxu0 0
    %1317 = vmatprep.subr.bf16.mxu0 0
    %1318 = vmatpush1.bf16.msra.mxu0 0
    %1319 = vmatprep.subr.bf16.mxu0 0
    %1320 = vmatpush1.bf16.msra.mxu0 0
    %1321 = vmatprep.subr.bf16.mxu0 0
    %1322 = vmatpush1.bf16.msra.mxu0 0
    %1323 = vmatprep.subr.bf16.mxu0 0
    %1324 = vmatpush1.bf16.msra.mxu0 0
    %1325 = vmatprep.subr.bf16.mxu0 0
    %1326 = vmatpush1.bf16.msra.mxu0 0
    %1327 = vmatprep.mubr.bf16.mxu0 0
    %1328 = vmatmul.mubr.bf16.gmra.mrb[0].mxu0 %v1294
    %v1329 = vpop.f32.mrb[0].mxu0
    %v1330 = vadd.f32 0.0, %v1329
    %v1331 = vpop.f32.mrb[0].mxu0
    %v1332 = vadd.f32 0.0, %v1331
    %v1333 = vpop.f32.mrb[0].mxu0
    %v1334 = vpop.f32.mrb[0].mxu0
    %1335 = vdwg.mxu0
    %1336 = vmatprep.subr.bf16.mxu0 %v525
    %1337 = vmatpush1.bf16.msra.mxu0 %v524
    %1338 = vmatprep.subr.bf16.mxu0 %v529
    %1339 = vmatpush1.bf16.msra.mxu0 %v528
    %1340 = vmatprep.subr.bf16.mxu0 %v533
    %1341 = vmatpush1.bf16.msra.mxu0 %v532
    %1342 = vmatprep.subr.bf16.mxu0 %v537
    %1343 = vmatpush1.bf16.msra.mxu0 %v536
    %1344 = vmatprep.subr.bf16.mxu0 %v541
    %1345 = vmatpush1.bf16.msra.mxu0 %v540
    %1346 = vmatprep.subr.bf16.mxu0 %v545
    %1347 = vmatpush1.bf16.msra.mxu0 %v544
    %1348 = vmatprep.subr.bf16.mxu0 %v549
    %1349 = vmatpush1.bf16.msra.mxu0 %v548
    %1350 = vmatprep.subr.bf16.mxu0 %v553
    %1351 = vmatpush1.bf16.msra.mxu0 %v552
    %1352 = vmatprep.subr.bf16.mxu0 0
    %1353 = vmatpush1.bf16.msra.mxu0 0
    %1354 = vmatprep.subr.bf16.mxu0 0
    %1355 = vmatpush1.bf16.msra.mxu0 0
    %1356 = vmatprep.subr.bf16.mxu0 0
    %1357 = vmatpush1.bf16.msra.mxu0 0
    %1358 = vmatprep.subr.bf16.mxu0 0
    %1359 = vmatpush1.bf16.msra.mxu0 0
    %1360 = vmatprep.subr.bf16.mxu0 0
    %1361 = vmatpush1.bf16.msra.mxu0 0
    %1362 = vmatprep.subr.bf16.mxu0 0
    %1363 = vmatpush1.bf16.msra.mxu0 0
    %1364 = vmatprep.subr.bf16.mxu0 0
    %1365 = vmatpush1.bf16.msra.mxu0 0
    %1366 = vmatprep.subr.bf16.mxu0 0
    %1367 = vmatpush1.bf16.msra.mxu0 0
    %1368 = vmatprep.mubr.bf16.mxu0 0
    %1369 = vmatmul.mubr.bf16.gmra.mrb[0].mxu0 %v1294
    %v1370 = vpop.f32.mrb[0].mxu0
    %v1371 = vadd.f32 0.0, %v1370
    %v1372 = vpop.f32.mrb[0].mxu0
    %v1373 = vadd.f32 0.0, %v1372
    %v1374 = vpop.f32.mrb[0].mxu0
    %v1375 = vpop.f32.mrb[0].mxu0
    %1376 = vdwg.mxu0
    %v1381 = vcombine.low %v1330, %v1332
    %v1382 = vcombine.low %v1371, %v1373
    %v1384 = vunpack.c.l.s4 1966171168
    %v1385 = vunpack.c.0.s8 %v1384
    %v1386 = vlaneseq
    %v1387 = vshrl.u32 %v1386, 7
    %v1388 = vsub.s32 %v1385, %v1387
    %v1389 = vrot.slane %v1381, %v1388
    %v1391 = vunpack.c.l.s4 1966171168
    %v1392 = vunpack.c.0.s8 %v1391
    %v1393 = vlaneseq
    %v1394 = vshrl.u32 %v1393, 7
    %v1395 = vsub.s32 %v1392, %v1394
    %v1396 = vrot.slane %v1382, %v1395
    %v1397 = vcombine.low %v1389, %v1396
    %v1399 = vunpack.c.l.s4 1966171168
    %v1400 = vunpack.c.0.s8 %v1399
    %v1401 = vlaneseq
    %v1402 = vshrl.u32 %v1401, 7
    %v1403 = vsub.s32 %v1400, %v1402
    %v1404 = vrot.slane %v1397, %v1403
    %v1406 = vadd.f32 %v1293, %v1404
    %v1407 = vxor.u32 %v1406, 2147483648
    %v1408 = vmul.f32 %v1407, 1.442695
    %v1409 = vpow.pop %v1408
    %v1410 = vadd.f32 %v1409, 1.0
    %v1411 = vrcp.pop %v1410
    %v1412 = vmul.f32 1.0, %v1411
    %v1414 = vrot.slane %v1406, 3
    %v1416 = vtanh.pop %v1414
    %v1418 = vrot.slane %v1412, 1
    %v1420 = vmul.f32 %v1418, %v1291
    %v1421 = vmul.f32 %v1412, %v1416
    %v1422 = vadd.f32 %v1420, %v1421
    %v1423 = vtanh.pop %v1422
    %v1424 = vrot.slane %v1412, 2
    %v1426 = vmul.f32 %v1424, %v1423
    %s1427 = sadd.s32 %s389, 5
    %p1428 = scmp.lt.s32.totalorder %s1427, 8
    %s1429 = scalar_select %p1428, 1, 0
    %v1430 = vstv %s1429
    %vm1431 = vcmp.eq.s32.totalorder %v1430, 1
    %v1432 = vsel %vm1431, %v1426, %v1290
    %v1433 = vsel %vm1431, %v1422, %v1291
    %s1434 = scalar_lea.vmem [#allocation2], 6
    %v1435 = vld [vmem:[%s1434] ss:$8 sm:$0xf]
    %v1436 = vpack.c.bf16 %v1432, %v1432
    %1437 = vmatprep.subr.bf16.mxu0 %v523
    %1438 = vmatpush1.bf16.msra.mxu0 %v522
    %1439 = vmatprep.subr.bf16.mxu0 %v527
    %1440 = vmatpush1.bf16.msra.mxu0 %v526
    %1441 = vmatprep.subr.bf16.mxu0 %v531
    %1442 = vmatpush1.bf16.msra.mxu0 %v530
    %1443 = vmatprep.subr.bf16.mxu0 %v535
    %1444 = vmatpush1.bf16.msra.mxu0 %v534
    %1445 = vmatprep.subr.bf16.mxu0 %v539
    %1446 = vmatpush1.bf16.msra.mxu0 %v538
    %1447 = vmatprep.subr.bf16.mxu0 %v543
    %1448 = vmatpush1.bf16.msra.mxu0 %v542
    %1449 = vmatprep.subr.bf16.mxu0 %v547
    %1450 = vmatpush1.bf16.msra.mxu0 %v546
    %1451 = vmatprep.subr.bf16.mxu0 %v551
    %1452 = vmatpush1.bf16.msra.mxu0 %v550
    %1453 = vmatprep.subr.bf16.mxu0 0
    %1454 = vmatpush1.bf16.msra.mxu0 0
    %1455 = vmatprep.subr.bf16.mxu0 0
    %1456 = vmatpush1.bf16.msra.mxu0 0
    %1457 = vmatprep.subr.bf16.mxu0 0
    %1458 = vmatpush1.bf16.msra.mxu0 0
    %1459 = vmatprep.subr.bf16.mxu0 0
    %1460 = vmatpush1.bf16.msra.mxu0 0
    %1461 = vmatprep.subr.bf16.mxu0 0
    %1462 = vmatpush1.bf16.msra.mxu0 0
    %1463 = vmatprep.subr.bf16.mxu0 0
    %1464 = vmatpush1.bf16.msra.mxu0 0
    %1465 = vmatprep.subr.bf16.mxu0 0
    %1466 = vmatpush1.bf16.msra.mxu0 0
    %1467 = vmatprep.subr.bf16.mxu0 0
    %1468 = vmatpush1.bf16.msra.mxu0 0
    %1469 = vmatprep.mubr.bf16.mxu0 0
    %1470 = vmatmul.mubr.bf16.gmra.mrb[0].mxu0 %v1436
    %v1471 = vpop.f32.mrb[0].mxu0
    %v1472 = vadd.f32 0.0, %v1471
    %v1473 = vpop.f32.mrb[0].mxu0
    %v1474 = vadd.f32 0.0, %v1473
    %v1475 = vpop.f32.mrb[0].mxu0
    %v1476 = vpop.f32.mrb[0].mxu0
    %1477 = vdwg.mxu0
    %1478 = vmatprep.subr.bf16.mxu0 %v525
    %1479 = vmatpush1.bf16.msra.mxu0 %v524
    %1480 = vmatprep.subr.bf16.mxu0 %v529
    %1481 = vmatpush1.bf16.msra.mxu0 %v528
    %1482 = vmatprep.subr.bf16.mxu0 %v533
    %1483 = vmatpush1.bf16.msra.mxu0 %v532
    %1484 = vmatprep.subr.bf16.mxu0 %v537
    %1485 = vmatpush1.bf16.msra.mxu0 %v536
    %1486 = vmatprep.subr.bf16.mxu0 %v541
    %1487 = vmatpush1.bf16.msra.mxu0 %v540
    %1488 = vmatprep.subr.bf16.mxu0 %v545
    %1489 = vmatpush1.bf16.msra.mxu0 %v544
    %1490 = vmatprep.subr.bf16.mxu0 %v549
    %1491 = vmatpush1.bf16.msra.mxu0 %v548
    %1492 = vmatprep.subr.bf16.mxu0 %v553
    %1493 = vmatpush1.bf16.msra.mxu0 %v552
    %1494 = vmatprep.subr.bf16.mxu0 0
    %1495 = vmatpush1.bf16.msra.mxu0 0
    %1496 = vmatprep.subr.bf16.mxu0 0
    %1497 = vmatpush1.bf16.msra.mxu0 0
    %1498 = vmatprep.subr.bf16.mxu0 0
    %1499 = vmatpush1.bf16.msra.mxu0 0
    %1500 = vmatprep.subr.bf16.mxu0 0
    %1501 = vmatpush1.bf16.msra.mxu0 0
    %1502 = vmatprep.subr.bf16.mxu0 0
    %1503 = vmatpush1.bf16.msra.mxu0 0
    %1504 = vmatprep.subr.bf16.mxu0 0
    %1505 = vmatpush1.bf16.msra.mxu0 0
    %1506 = vmatprep.subr.bf16.mxu0 0
    %1507 = vmatpush1.bf16.msra.mxu0 0
    %1508 = vmatprep.subr.bf16.mxu0 0
    %1509 = vmatpush1.bf16.msra.mxu0 0
    %1510 = vmatprep.mubr.bf16.mxu0 0
    %1511 = vmatmul.mubr.bf16.gmra.mrb[0].mxu0 %v1436
    %v1512 = vpop.f32.mrb[0].mxu0
    %v1513 = vadd.f32 0.0, %v1512
    %v1514 = vpop.f32.mrb[0].mxu0
    %v1515 = vadd.f32 0.0, %v1514
    %v1516 = vpop.f32.mrb[0].mxu0
    %v1517 = vpop.f32.mrb[0].mxu0
    %1518 = vdwg.mxu0
    %v1523 = vcombine.low %v1472, %v1474
    %v1524 = vcombine.low %v1513, %v1515
    %v1526 = vunpack.c.l.s4 1966171168
    %v1527 = vunpack.c.0.s8 %v1526
    %v1528 = vlaneseq
    %v1529 = vshrl.u32 %v1528, 7
    %v1530 = vsub.s32 %v1527, %v1529
    %v1531 = vrot.slane %v1523, %v1530
    %v1533 = vunpack.c.l.s4 1966171168
    %v1534 = vunpack.c.0.s8 %v1533
    %v1535 = vlaneseq
    %v1536 = vshrl.u32 %v1535, 7
    %v1537 = vsub.s32 %v1534, %v1536
    %v1538 = vrot.slane %v1524, %v1537
    %v1539 = vcombine.low %v1531, %v1538
    %v1541 = vunpack.c.l.s4 1966171168
    %v1542 = vunpack.c.0.s8 %v1541
    %v1543 = vlaneseq
    %v1544 = vshrl.u32 %v1543, 7
    %v1545 = vsub.s32 %v1542, %v1544
    %v1546 = vrot.slane %v1539, %v1545
    %v1548 = vadd.f32 %v1435, %v1546
    %v1549 = vxor.u32 %v1548, 2147483648
    %v1550 = vmul.f32 %v1549, 1.442695
    %v1551 = vpow.pop %v1550
    %v1552 = vadd.f32 %v1551, 1.0
    %v1553 = vrcp.pop %v1552
    %v1554 = vmul.f32 1.0, %v1553
    %v1556 = vrot.slane %v1548, 3
    %v1558 = vtanh.pop %v1556
    %v1560 = vrot.slane %v1554, 1
    %v1562 = vmul.f32 %v1560, %v1433
    %v1563 = vmul.f32 %v1554, %v1558
    %v1564 = vadd.f32 %v1562, %v1563
    %v1565 = vtanh.pop %v1564
    %v1566 = vrot.slane %v1554, 2
    %v1568 = vmul.f32 %v1566, %v1565
    %s1569 = sadd.s32 %s389, 6
    %p1570 = scmp.lt.s32.totalorder %s1569, 8
    %s1571 = scalar_select %p1570, 1, 0
    %v1572 = vstv %s1571
    %vm1573 = vcmp.eq.s32.totalorder %v1572, 1
    %v1574 = vsel %vm1573, %v1568, %v1432
    %v1575 = vsel %vm1573, %v1564, %v1433
    %s1576 = scalar_lea.vmem [#allocation2], 7
    %v1577 = vld [vmem:[%s1576] ss:$8 sm:$0xf]
    %v1578 = vpack.c.bf16 %v1574, %v1574
    %1579 = vmatprep.subr.bf16.mxu0 %v523
    %1580 = vmatpush1.bf16.msra.mxu0 %v522
    %1581 = vmatprep.subr.bf16.mxu0 %v527
    %1582 = vmatpush1.bf16.msra.mxu0 %v526
    %1583 = vmatprep.subr.bf16.mxu0 %v531
    %1584 = vmatpush1.bf16.msra.mxu0 %v530
    %1585 = vmatprep.subr.bf16.mxu0 %v535
    %1586 = vmatpush1.bf16.msra.mxu0 %v534
    %1587 = vmatprep.subr.bf16.mxu0 %v539
    %1588 = vmatpush1.bf16.msra.mxu0 %v538
    %1589 = vmatprep.subr.bf16.mxu0 %v543
    %1590 = vmatpush1.bf16.msra.mxu0 %v542
    %1591 = vmatprep.subr.bf16.mxu0 %v547
    %1592 = vmatpush1.bf16.msra.mxu0 %v546
    %1593 = vmatprep.subr.bf16.mxu0 %v551
    %1594 = vmatpush1.bf16.msra.mxu0 %v550
    %1595 = vmatprep.subr.bf16.mxu0 0
    %1596 = vmatpush1.bf16.msra.mxu0 0
    %1597 = vmatprep.subr.bf16.mxu0 0
    %1598 = vmatpush1.bf16.msra.mxu0 0
    %1599 = vmatprep.subr.bf16.mxu0 0
    %1600 = vmatpush1.bf16.msra.mxu0 0
    %1601 = vmatprep.subr.bf16.mxu0 0
    %1602 = vmatpush1.bf16.msra.mxu0 0
    %1603 = vmatprep.subr.bf16.mxu0 0
    %1604 = vmatpush1.bf16.msra.mxu0 0
    %1605 = vmatprep.subr.bf16.mxu0 0
    %1606 = vmatpush1.bf16.msra.mxu0 0
    %1607 = vmatprep.subr.bf16.mxu0 0
    %1608 = vmatpush1.bf16.msra.mxu0 0
    %1609 = vmatprep.subr.bf16.mxu0 0
    %1610 = vmatpush1.bf16.msra.mxu0 0
    %1611 = vmatprep.mubr.bf16.mxu0 0
    %1612 = vmatmul.mubr.bf16.gmra.mrb[0].mxu0 %v1578
    %v1613 = vpop.f32.mrb[0].mxu0
    %v1614 = vadd.f32 0.0, %v1613
    %v1615 = vpop.f32.mrb[0].mxu0
    %v1616 = vadd.f32 0.0, %v1615
    %v1617 = vpop.f32.mrb[0].mxu0
    %v1618 = vpop.f32.mrb[0].mxu0
    %1619 = vdwg.mxu0
    %1620 = vmatprep.subr.bf16.mxu0 %v525
    %1621 = vmatpush1.bf16.msra.mxu0 %v524
    %1622 = vmatprep.subr.bf16.mxu0 %v529
    %1623 = vmatpush1.bf16.msra.mxu0 %v528
    %1624 = vmatprep.subr.bf16.mxu0 %v533
    %1625 = vmatpush1.bf16.msra.mxu0 %v532
    %1626 = vmatprep.subr.bf16.mxu0 %v537
    %1627 = vmatpush1.bf16.msra.mxu0 %v536
    %1628 = vmatprep.subr.bf16.mxu0 %v541
    %1629 = vmatpush1.bf16.msra.mxu0 %v540
    %1630 = vmatprep.subr.bf16.mxu0 %v545
    %1631 = vmatpush1.bf16.msra.mxu0 %v544
    %1632 = vmatprep.subr.bf16.mxu0 %v549
    %1633 = vmatpush1.bf16.msra.mxu0 %v548
    %1634 = vmatprep.subr.bf16.mxu0 %v553
    %1635 = vmatpush1.bf16.msra.mxu0 %v552
    %1636 = vmatprep.subr.bf16.mxu0 0
    %1637 = vmatpush1.bf16.msra.mxu0 0
    %1638 = vmatprep.subr.bf16.mxu0 0
    %1639 = vmatpush1.bf16.msra.mxu0 0
    %1640 = vmatprep.subr.bf16.mxu0 0
    %1641 = vmatpush1.bf16.msra.mxu0 0
    %1642 = vmatprep.subr.bf16.mxu0 0
    %1643 = vmatpush1.bf16.msra.mxu0 0
    %1644 = vmatprep.subr.bf16.mxu0 0
    %1645 = vmatpush1.bf16.msra.mxu0 0
    %1646 = vmatprep.subr.bf16.mxu0 0
    %1647 = vmatpush1.bf16.msra.mxu0 0
    %1648 = vmatprep.subr.bf16.mxu0 0
    %1649 = vmatpush1.bf16.msra.mxu0 0
    %1650 = vmatprep.subr.bf16.mxu0 0
    %1651 = vmatpush1.bf16.msra.mxu0 0
    %1652 = vmatprep.mubr.bf16.mxu0 0
    %1653 = vmatmul.mubr.bf16.gmra.mrb[0].mxu0 %v1578
    %v1654 = vpop.f32.mrb[0].mxu0
    %v1655 = vadd.f32 0.0, %v1654
    %v1656 = vpop.f32.mrb[0].mxu0
    %v1657 = vadd.f32 0.0, %v1656
    %v1658 = vpop.f32.mrb[0].mxu0
    %v1659 = vpop.f32.mrb[0].mxu0
    %1660 = vdwg.mxu0
    %v1665 = vcombine.low %v1614, %v1616
    %v1666 = vcombine.low %v1655, %v1657
    %v1668 = vunpack.c.l.s4 1966171168
    %v1669 = vunpack.c.0.s8 %v1668
    %v1670 = vlaneseq
    %v1671 = vshrl.u32 %v1670, 7
    %v1672 = vsub.s32 %v1669, %v1671
    %v1673 = vrot.slane %v1665, %v1672
    %v1675 = vunpack.c.l.s4 1966171168
    %v1676 = vunpack.c.0.s8 %v1675
    %v1677 = vlaneseq
    %v1678 = vshrl.u32 %v1677, 7
    %v1679 = vsub.s32 %v1676, %v1678
    %v1680 = vrot.slane %v1666, %v1679
    %v1681 = vcombine.low %v1673, %v1680
    %v1683 = vunpack.c.l.s4 1966171168
    %v1684 = vunpack.c.0.s8 %v1683
    %v1685 = vlaneseq
    %v1686 = vshrl.u32 %v1685, 7
    %v1687 = vsub.s32 %v1684, %v1686
    %v1688 = vrot.slane %v1681, %v1687
    %v1690 = vadd.f32 %v1577, %v1688
    %v1691 = vxor.u32 %v1690, 2147483648
    %v1692 = vmul.f32 %v1691, 1.442695
    %v1693 = vpow.pop %v1692
    %v1694 = vadd.f32 %v1693, 1.0
    %v1695 = vrcp.pop %v1694
    %v1696 = vmul.f32 1.0, %v1695
    %v1698 = vrot.slane %v1690, 3
    %v1700 = vtanh.pop %v1698
    %v1702 = vrot.slane %v1696, 1
    %v1704 = vmul.f32 %v1702, %v1575
    %v1705 = vmul.f32 %v1696, %v1700
    %v1706 = vadd.f32 %v1704, %v1705
    %v1707 = vtanh.pop %v1706
    %v1708 = vrot.slane %v1696, 2
    %v1710 = vmul.f32 %v1708, %v1707
    %s1711 = sadd.s32 %s389, 7
    %p1712 = scmp.lt.s32.totalorder %s1711, 8
    %s1713 = scalar_select %p1712, 1, 0
    %v1714 = vstv %s1713
    %vm1715 = vcmp.eq.s32.totalorder %v1714, 1
    %v1716 = vsel %vm1715, %v1710, %v1574
    %v1717 = vsel %vm1715, %v1706, %v1575
    %1718 = vst [vmem:[#allocation3] sm:$0x1] %v1716
    %1719 = vst [vmem:[#allocation4] sm:$0x1] %v1717
    %1720 = vst [vmem:[#allocation14] sm:$0x1] %v1716
    %1721 = vst [vmem:[#allocation16] sm:$0x1] %v1717
    // Predicated region
    $region46: #{tpu_custom_call.1} parent=1 // pred_check
      %p1722 = pneg %p82
    $region47: #{tpu_custom_call.1} parent=1 // pred_check_branch
      %1724 = sbr.rel (%p1722) target = $region49
    $region48: #{tpu_custom_call.1} parent=1 // pred_region
      %v1725 = vpack.c.bf16 %v1716, %v1716
      %v1726 = vld [vmem:[#allocation11] sm:$0xf]
      %v1727 = vld [vmem:[#allocation11 + $0x4] sm:$0xf]
      %v1728 = vld [vmem:[#allocation11 + $0x8] sm:$0xf]
      %v1729 = vld [vmem:[#allocation11 + $0xc] sm:$0xf]
      %v1730 = vld [vmem:[#allocation11 + $0x10] sm:$0xf]
      %v1731 = vld [vmem:[#allocation11 + $0x14] sm:$0xf]
      %v1732 = vld [vmem:[#allocation11 + $0x18] sm:$0xf]
      %v1733 = vld [vmem:[#allocation11 + $0x1c] sm:$0xf]
      %v1734 = vld [vmem:[#allocation11 + $0x20] sm:$0xf]
      %v1735 = vld [vmem:[#allocation11 + $0x24] sm:$0xf]
      %v1736 = vld [vmem:[#allocation11 + $0x28] sm:$0xf]
      %v1737 = vld [vmem:[#allocation11 + $0x2c] sm:$0xf]
      %v1738 = vld [vmem:[#allocation11 + $0x30] sm:$0xf]
      %v1739 = vld [vmem:[#allocation11 + $0x34] sm:$0xf]
      %v1740 = vld [vmem:[#allocation11 + $0x38] sm:$0xf]
      %v1741 = vld [vmem:[#allocation11 + $0x3c] sm:$0xf]
      %v1742 = vld [vmem:[%s5] sm:$0x1]
      %v1759 = vunpack.c.l.b16 %v1726
      %v1760 = vunpack.c.l.b16 %v1727
      %v1761 = vunpack.c.l.b16 %v1728
      %v1762 = vunpack.c.l.b16 %v1729
      %v1763 = vunpack.c.l.b16 %v1730
      %v1764 = vunpack.c.l.b16 %v1731
      %v1765 = vunpack.c.l.b16 %v1732
      %v1766 = vunpack.c.l.b16 %v1733
      %v1767 = vunpack.c.l.b16 %v1734
      %v1768 = vunpack.c.l.b16 %v1735
      %v1769 = vunpack.c.l.b16 %v1736
      %v1770 = vunpack.c.l.b16 %v1737
      %v1771 = vunpack.c.l.b16 %v1738
      %v1772 = vunpack.c.l.b16 %v1739
      %v1773 = vunpack.c.l.b16 %v1740
      %v1774 = vunpack.c.l.b16 %v1741
      %v1775 = vpack.c.b16 %v1760, %v1759
      %v1776 = vpack.c.b16 %v1762, %v1761
      %v1777 = vpack.c.b16 %v1764, %v1763
      %v1778 = vpack.c.b16 %v1766, %v1765
      %v1779 = vpack.c.b16 %v1768, %v1767
      %v1780 = vpack.c.b16 %v1770, %v1769
      %v1781 = vpack.c.b16 %v1772, %v1771
      %v1782 = vpack.c.b16 %v1774, %v1773
      %1791 = vmatprep.subr.bf16.mxu0 0
      %1792 = vmatpush1.bf16.msra.mxu0 %v1775
      %1793 = vmatprep.subr.bf16.mxu0 0
      %1794 = vmatpush1.bf16.msra.mxu0 %v1776
      %1795 = vmatprep.subr.bf16.mxu0 0
      %1796 = vmatpush1.bf16.msra.mxu0 %v1777
      %1797 = vmatprep.subr.bf16.mxu0 0
      %1798 = vmatpush1.bf16.msra.mxu0 %v1778
      %1799 = vmatprep.subr.bf16.mxu0 0
      %1800 = vmatpush1.bf16.msra.mxu0 %v1779
      %1801 = vmatprep.subr.bf16.mxu0 0
      %1802 = vmatpush1.bf16.msra.mxu0 %v1780
      %1803 = vmatprep.subr.bf16.mxu0 0
      %1804 = vmatpush1.bf16.msra.mxu0 %v1781
      %1805 = vmatprep.subr.bf16.mxu0 0
      %1806 = vmatpush1.bf16.msra.mxu0 %v1782
      %1807 = vmatprep.subr.bf16.mxu0 0
      %1808 = vmatpush1.bf16.msra.mxu0 0
      %1809 = vmatprep.subr.bf16.mxu0 0
      %1810 = vmatpush1.bf16.msra.mxu0 0
      %1811 = vmatprep.subr.bf16.mxu0 0
      %1812 = vmatpush1.bf16.msra.mxu0 0
      %1813 = vmatprep.subr.bf16.mxu0 0
      %1814 = vmatpush1.bf16.msra.mxu0 0
      %1815 = vmatprep.subr.bf16.mxu0 0
      %1816 = vmatpush1.bf16.msra.mxu0 0
      %1817 = vmatprep.subr.bf16.mxu0 0
      %1818 = vmatpush1.bf16.msra.mxu0 0
      %1819 = vmatprep.subr.bf16.mxu0 0
      %1820 = vmatpush1.bf16.msra.mxu0 0
      %1821 = vmatprep.subr.bf16.mxu0 0
      %1822 = vmatpush1.bf16.msra.mxu0 0
      %1823 = vmatprep.mubr.bf16.mxu0 0
      %1824 = vmatmul.mubr.bf16.gmra.mrb[0].mxu0 %v1725
      %v1825 = vpop.f32.mrb[0].mxu0
      %v1826 = vadd.f32 %v1742, %v1825
      %v1827 = vpop.f32.mrb[0].mxu0
      %v1828 = vpop.f32.mrb[0].mxu0
      %v1829 = vpop.f32.mrb[0].mxu0
      %1830 = vdwg.mxu0
      %vm1831 = vcmask 1040384
      %v1832 = vsel %vm1831, %v1826, -inf
      %1833 = vmax.xlane.f32.xlu0 %v1832
      %v1834 = vpop.xlane.xlu0 %1833
      %v1835 = vsub.f32 %v1826, %v1834
      %v1836 = vmul.f32 %v1835, 1.442695
      %v1837 = vpow.pop %v1836
      %v1838 = vsel %vm1831, %v1837, 0.0
      %1839 = vadd.xlane.f32.xlu0 %v1838
      %v1840 = vpop.xlane.xlu0 %1839
      %v1841 = vrcp.pop %v1840
      %v1842 = vmul.f32 %v1837, %v1841
      %1843 = vst [vmem:[#allocation13] sm:$0x1] %v1842
    $region49: #{tpu_custom_call.1} parent=1 // pred_fallthru
      _
    // Predicated region
    $region50: #{tpu_custom_call.1} parent=1 // pred_check
      _
    $region51: #{tpu_custom_call.1} parent=1 // pred_check_branch
      %1845 = sbr.rel (0) target = $region53
    $region52: #{tpu_custom_call.1} parent=1 // pred_region
      %s1847 = ssub.s32 16, 16
      %1848 = vsyncadd [#allocation7], %s1847
      %s1850 = sshll.u32 [#allocation13], 4
      %s1851 = int_to_ptr.vmem [resolvable:$true] %s1850
      %1853 = dma.vmem_to_hbm [thread:$0]  %s1851, 16, %s6, [#allocation7]
    $region53: #{tpu_custom_call.1} parent=1 // pred_fallthru
      _
    // Predicated region
    $region54: #{tpu_custom_call.1} parent=1 // pred_check
      _
    $region55: #{tpu_custom_call.1} parent=1 // pred_check_branch
      %1855 = sbr.rel (0) target = $region57
    $region56: #{tpu_custom_call.1} parent=1 // pred_region
      %s1857 = ssub.s32 16, 16
      %1858 = vsyncadd [#allocation15], %s1857
      %s1860 = sshll.u32 [#allocation14], 4
      %s1861 = int_to_ptr.vmem [resolvable:$true] %s1860
      %1863 = dma.vmem_to_hbm [thread:$0]  %s1861, 16, %s7, [#allocation15]
    $region57: #{tpu_custom_call.1} parent=1 // pred_fallthru
      _
    // Predicated region
    $region58: #{tpu_custom_call.1} parent=1 // pred_check
      _
    $region59: #{tpu_custom_call.1} parent=1 // pred_check_branch
      %1865 = sbr.rel (0) target = $region61
    $region60: #{tpu_custom_call.1} parent=1 // pred_region
      %s1867 = ssub.s32 16, 16
      %1868 = vsyncadd [#allocation15], %s1867
      %s1870 = sshll.u32 [#allocation16], 4
      %s1871 = int_to_ptr.vmem [resolvable:$true] %s1870
      %1873 = dma.vmem_to_hbm [thread:$0]  %s1871, 16, %s8, [#allocation15]
    $region61: #{tpu_custom_call.1} parent=1 // pred_fallthru
      _
    // Predicated region
    $region62: #{tpu_custom_call.1} parent=1 // pred_check
      _
    $region63: #{tpu_custom_call.1} parent=1 // pred_check_branch
      %1875 = sbr.rel (0) target = $region65
    $region64: #{tpu_custom_call.1} parent=1 // pred_region
      %1876 = dma.done [#allocation7], 16
    $region65: #{tpu_custom_call.1} parent=1 // pred_fallthru
      _
    // Predicated region
    $region66: #{tpu_custom_call.1} parent=1 // pred_check
      _
    $region67: #{tpu_custom_call.1} parent=1 // pred_check_branch
      %1878 = sbr.rel (0) target = $region69
    $region68: #{tpu_custom_call.1} parent=1 // pred_region
      %1879 = dma.done [#allocation15], 16
    $region69: #{tpu_custom_call.1} parent=1 // pred_fallthru
      _
    // Predicated region
    $region70: #{tpu_custom_call.1} parent=1 // pred_check
      _
    $region71: #{tpu_custom_call.1} parent=1 // pred_check_branch
      %1881 = sbr.rel (0) target = $region73
    $region72: #{tpu_custom_call.1} parent=1 // pred_region
      %1882 = dma.done [#allocation15], 16
    $region73: #{tpu_custom_call.1} parent=1 // pred_fallthru
      _
    %1883 = vsyncpa [#allocation6], 1
    %1884 = vsyncpa [#allocation9], 1
    %1885 = vsyncpa [#allocation12], 1
    %1886 = vsyncpa [#allocation7], 1
    %1887 = vsyncpa [#allocation15], 1

</llo_original>
